<compile_context>
chip_gen: v6e
topology: v6e:2x2x1
jax: 0.10.0
libtpu: 0.0.40
codegen_flags: <defaults>
</compile_context>

<pallas_src>
import jax
import jax.numpy as jnp
from jax.experimental import pallas as pl
from jax.experimental.pallas import tpu as pltpu


def _round_up(x, m):
    return (x + m - 1) // m * m


# ----------------------------------------------------------------------------
# Pallas kernel: fused 3-layer MLP with concat folded into layer 0.
#   layer0: z@w0_z + c@w0_c + b0 -> ReLU
#   layer1: h @ w1 + b1          -> ReLU
#   layer2: h @ w2 + b2          -> Sigmoid
# Matmul operands are bf16, accumulation and elementwise math are f32.
# ----------------------------------------------------------------------------
def _cvae_decoder_mlp_kernel(z_ref, c_ref,
                             w0z_ref, w0c_ref, b0_ref,
                             w1_ref, b1_ref,
                             w2_ref, b2_ref,
                             o_ref):
    zb = z_ref[...]
    cb = c_ref[...]

    # Layer 0: split-input Linear (fused concat) + ReLU
    h = (jnp.dot(zb, w0z_ref[...], preferred_element_type=jnp.float32)
         + jnp.dot(cb, w0c_ref[...], preferred_element_type=jnp.float32)
         + b0_ref[...])
    h = jnp.maximum(h, 0.0)

    # Layer 1: Linear + ReLU (cast activations to bf16 only for the MXU feed)
    h = jnp.dot(h.astype(w1_ref.dtype), w1_ref[...],
                preferred_element_type=jnp.float32) + b1_ref[...]
    h = jnp.maximum(h, 0.0)

    # Layer 2: Linear + Sigmoid
    h = jnp.dot(h.astype(w2_ref.dtype), w2_ref[...],
                preferred_element_type=jnp.float32) + b2_ref[...]
    h = jax.nn.sigmoid(h)

    o_ref[...] = h.astype(o_ref.dtype)


# ----------------------------------------------------------------------------
# Parameter prep: transpose (out,in)->(in,out), split w0 by (z, c), zero-pad
# hidden dims to 128 lanes, cast weights to the bf16 compute dtype.
# ----------------------------------------------------------------------------
def prepare_decoder_params(raw_params, latent_dim, cond_dim, *,
                           hidden_pad=128, compute_dtype=jnp.bfloat16):
    (w0, b0), (w1, b1), (w2, b2) = raw_params
    D1, D0 = w0.shape
    D2 = w1.shape[0]
    D3 = w2.shape[0]
    assert D0 == latent_dim + cond_dim

    w0t, w1t, w2t = w0.T, w1.T, w2.T            # (in, out)
    w0z, w0c = w0t[:latent_dim], w0t[latent_dim:]

    D1p = _round_up(D1, hidden_pad)
    D2p = _round_up(D2, hidden_pad)

    pad_out = lambda w, dp: jnp.pad(w, ((0, 0), (0, dp - w.shape[1])))
    pad_in = lambda w, dp: jnp.pad(w, ((0, dp - w.shape[0]), (0, 0)))

    w0z_p = pad_out(w0z, D1p)
    w0c_p = pad_out(w0c, D1p)
    w1_p = pad_in(pad_out(w1t, D2p), D1p)
    w2_p = pad_in(w2t, D2p)

    return {
        "w0z": w0z_p.astype(compute_dtype),
        "w0c": w0c_p.astype(compute_dtype),
        "w1": w1_p.astype(compute_dtype),
        "w2": w2_p.astype(compute_dtype),
        "b0": jnp.pad(b0, (0, D1p - D1)).reshape(1, D1p).astype(jnp.float32),
        "b1": jnp.pad(b1, (0, D2p - D2)).reshape(1, D2p).astype(jnp.float32),
        "b2": b2.reshape(1, D3).astype(jnp.float32),
    }


# ----------------------------------------------------------------------------
# Wrapper
# ----------------------------------------------------------------------------
def cvae_decoder_forward(z, c, dparams, *, batch_tile=256):
    """Pallas implementation of CVAEDecoder.forward.

    z: (B, latent_dim) float32
    c: (B, cond_dim)   float32
    dparams: output of prepare_decoder_params.
    """
    B = z.shape[0]
    latent_dim = dparams["w0z"].shape[0]
    cond_dim = dparams["w0c"].shape[0]
    D1p = dparams["w0z"].shape[1]
    D2p = dparams["w1"].shape[1]
    D3 = dparams["w2"].shape[1]
    compute_dtype = dparams["w0z"].dtype

    # bf16 matmul feeds -> keep the batch tile a multiple of 16; pad the batch
    # to a whole number of tiles instead of asserting divisibility.
    bt = max(16, min(batch_tile, _round_up(B, 16)))
    bt = _round_up(bt, 16)
    B_pad = _round_up(B, bt)
    grid = (B_pad // bt,)

    zp = z.astype(compute_dtype)
    cp = c.astype(compute_dtype)
    if B_pad != B:
        zp = jnp.pad(zp, ((0, B_pad - B), (0, 0)))
        cp = jnp.pad(cp, ((0, B_pad - B), (0, 0)))

    # Weights/biases are tiny: hand the full matrices to every grid step
    # (block shape == full array shape satisfies the (8,128) rule).
    full = lambda a: pl.BlockSpec(a.shape, lambda i: (0,) * a.ndim)

    weight_elems = (latent_dim * D1p + cond_dim * D1p + D1p * D2p + D2p * D3)
    flops = 2 * B_pad * (latent_dim * D1p + cond_dim * D1p + D1p * D2p + D2p * D3)
    bytes_accessed = (B_pad * (latent_dim + cond_dim) * 2     # bf16 inputs
                      + weight_elems * 2                      # bf16 weights
                      + (D1p + D2p + D3) * 4                  # f32 biases
                      + B_pad * D3 * 4)                       # f32 output
    cost = pl.CostEstimate(flops=flops,
                           transcendentals=B_pad * D3,        # sigmoid
                           bytes_accessed=bytes_accessed)

    out = pl.pallas_call(
        _cvae_decoder_mlp_kernel,
        out_shape=jax.ShapeDtypeStruct((B_pad, D3), jnp.float32),
        grid_spec=pltpu.PrefetchScalarGridSpec(
            num_scalar_prefetch=0,
            grid=grid,
            in_specs=[
                pl.BlockSpec((bt, latent_dim), lambda i: (i, 0)),  # z tile
                pl.BlockSpec((bt, cond_dim), lambda i: (i, 0)),    # c tile
                full(dparams["w0z"]), full(dparams["w0c"]), full(dparams["b0"]),
                full(dparams["w1"]), full(dparams["b1"]),
                full(dparams["w2"]), full(dparams["b2"]),
            ],
            out_specs=pl.BlockSpec((bt, D3), lambda i: (i, 0)),
        ),
        compiler_params=pltpu.CompilerParams(
            dimension_semantics=("parallel",)),
        cost_estimate=cost,
    )(zp, cp,
      dparams["w0z"], dparams["w0c"], dparams["b0"],
      dparams["w1"], dparams["b1"],
      dparams["w2"], dparams["b2"])

    return out[:B] if B_pad != B else out


# ----------------------------------------------------------------------------
# Deterministic parameter construction (mirrors nn.Linear default init:
# weight/bias ~ U(-1/sqrt(fan_in), 1/sqrt(fan_in)); weight stored (out, in)).
# ----------------------------------------------------------------------------
def init_params(key, layer_sizes):
    params = []
    for (in_size, out_size) in layer_sizes:
        key, kw, kb = jax.random.split(key, 3)
        bound = float(in_size) ** -0.5
        w = jax.random.uniform(kw, (out_size, in_size), jnp.float32, -bound, bound)
        b = jax.random.uniform(kb, (out_size,), jnp.float32, -bound, bound)
        params.append((w, b))
    return params


# Pure-JAX f32 reference (exact original semantics) for correctness check.
def reference_forward(z, c, raw_params):
    x = jnp.concatenate([z, c], axis=-1)
    (w0, b0), (w1, b1), (w2, b2) = raw_params
    h = jnp.maximum(x @ w0.T + b0, 0.0)
    h = jnp.maximum(h @ w1.T + b1, 0.0)
    return jax.nn.sigmoid(h @ w2.T + b2)


if __name__ == "__main__":
    # CVAEDecoderParams analog:
    #   latent_dim=16, cond_dim=8
    #   layer_sizes       = [(24, 32), (32, 64), (64, 16)]
    #   layer_activations = [ReLU(),   ReLU(),   Sigmoid()]
    latent_dim, cond_dim = 16, 8
    layer_sizes = [(latent_dim + cond_dim, 32), (32, 64), (64, 16)]

    key = jax.random.PRNGKey(0)
    kz, kc, kp = jax.random.split(key, 3)
    raw_params = init_params(kp, layer_sizes)
    dparams = prepare_decoder_params(raw_params, latent_dim, cond_dim)

    # Main check: batch large enough for >=2 parallel grid steps (v7x megacore).
    batch = 512
    z = jax.random.normal(kz, (batch, latent_dim), jnp.float32)
    c = jax.random.normal(kc, (batch, cond_dim), jnp.float32)

    out = cvae_decoder_forward(z, c, dparams, batch_tile=256)
    out = jax.block_until_ready(out)
    ref = reference_forward(z, c, raw_params)
    assert out.shape == (batch, layer_sizes[-1][1])
    assert jnp.allclose(out, ref, atol=2e-2, rtol=2e-2), "mismatch vs reference (B=512)"

    # Ragged-batch check: exercises the pad + slice tail path.
    batch2 = 100
    z2 = jax.random.normal(jax.random.PRNGKey(1), (batch2, latent_dim), jnp.float32)
    c2 = jax.random.normal(jax.random.PRNGKey(2), (batch2, cond_dim), jnp.float32)
    out2 = jax.block_until_ready(cvae_decoder_forward(z2, c2, dparams, batch_tile=256))
    ref2 = reference_forward(z2, c2, raw_params)
    assert out2.shape == (batch2, layer_sizes[-1][1])
    assert jnp.allclose(out2, ref2, atol=2e-2, rtol=2e-2), "mismatch vs reference (B=100)"

    print("KERNEL_OK")
</pallas_src>

<mosaic_0001>
module attributes {stable_mosaic.version = 11 : i64} {
  func.func @_cvae_decoder_mlp_kernel(%arg0: i32, %arg1: memref<256x16xbf16, #tpu.memory_space<vmem>>, %arg2: memref<256x8xbf16, #tpu.memory_space<vmem>>, %arg3: memref<16x128xbf16, #tpu.memory_space<vmem>>, %arg4: memref<8x128xbf16, #tpu.memory_space<vmem>>, %arg5: memref<1x128xf32, #tpu.memory_space<vmem>>, %arg6: memref<128x128xbf16, #tpu.memory_space<vmem>>, %arg7: memref<1x128xf32, #tpu.memory_space<vmem>>, %arg8: memref<128x16xbf16, #tpu.memory_space<vmem>>, %arg9: memref<1x16xf32, #tpu.memory_space<vmem>>, %arg10: memref<256x16xf32, #tpu.memory_space<vmem>>) attributes {dimension_semantics = [#tpu.dimension_semantics<parallel>], iteration_bounds = array<i64: 2>, scalar_prefetch = 0 : i64, scratch_operands = 0 : i64, tpu.core_type = #tpu.core_type<tc>, window_params = [{transform_indices = @transform_0, window_bounds = array<i64: 256, 16>}, {transform_indices = @transform_1, window_bounds = array<i64: 256, 8>}, {pipeline_mode = #tpu.pipeline_mode<synchronous>, transform_indices = @transform_2, window_bounds = array<i64: 16, 128>}, {pipeline_mode = #tpu.pipeline_mode<synchronous>, transform_indices = @transform_3, window_bounds = array<i64: 8, 128>}, {pipeline_mode = #tpu.pipeline_mode<synchronous>, transform_indices = @transform_4, window_bounds = array<i64: 1, 128>}, {pipeline_mode = #tpu.pipeline_mode<synchronous>, transform_indices = @transform_5, window_bounds = array<i64: 128, 128>}, {pipeline_mode = #tpu.pipeline_mode<synchronous>, transform_indices = @transform_6, window_bounds = array<i64: 1, 128>}, {pipeline_mode = #tpu.pipeline_mode<synchronous>, transform_indices = @transform_7, window_bounds = array<i64: 128, 16>}, {pipeline_mode = #tpu.pipeline_mode<synchronous>, transform_indices = @transform_8, window_bounds = array<i64: 1, 16>}, {transform_indices = @transform_9, window_bounds = array<i64: 256, 16>}]} {
    %c0 = arith.constant 0 : index
    %c0_0 = arith.constant 0 : index
    %0 = vector.load %arg1[%c0, %c0_0] : memref<256x16xbf16, #tpu.memory_space<vmem>>, vector<256x16xbf16>
    %c0_1 = arith.constant 0 : index
    %c0_2 = arith.constant 0 : index
    %1 = vector.load %arg2[%c0_1, %c0_2] : memref<256x8xbf16, #tpu.memory_space<vmem>>, vector<256x8xbf16>
    %c0_3 = arith.constant 0 : index
    %c0_4 = arith.constant 0 : index
    %2 = vector.load %arg3[%c0_3, %c0_4] : memref<16x128xbf16, #tpu.memory_space<vmem>>, vector<16x128xbf16>
    %cst = arith.constant dense<0.000000e+00> : vector<256x128xf32>
    %3 = tpu.matmul %0, %2, %cst {dimension_numbers = #tpu.dot_dimension_numbers<[1], [0], [0], [1], [0, 0, 1, 1], [], []>} : vector<256x16xbf16>, vector<16x128xbf16>, vector<256x128xf32> -> vector<256x128xf32>
    %c0_5 = arith.constant 0 : index
    %c0_6 = arith.constant 0 : index
    %4 = vector.load %arg4[%c0_5, %c0_6] : memref<8x128xbf16, #tpu.memory_space<vmem>>, vector<8x128xbf16>
    %cst_7 = arith.constant dense<0.000000e+00> : vector<256x128xf32>
    %5 = tpu.matmul %1, %4, %cst_7 {dimension_numbers = #tpu.dot_dimension_numbers<[1], [0], [0], [1], [0, 0, 1, 1], [], []>} : vector<256x8xbf16>, vector<8x128xbf16>, vector<256x128xf32> -> vector<256x128xf32>
    %6 = arith.addf %3, %5 : vector<256x128xf32>
    %c0_8 = arith.constant 0 : index
    %c0_9 = arith.constant 0 : index
    %7 = vector.load %arg5[%c0_8, %c0_9] : memref<1x128xf32, #tpu.memory_space<vmem>>, vector<1x128xf32>
    %8 = vector.broadcast %7 : vector<1x128xf32> to vector<256x128xf32>
    %9 = arith.addf %6, %8 : vector<256x128xf32>
    %cst_10 = arith.constant 0.000000e+00 : f32
    %10 = vector.broadcast %cst_10 : f32 to vector<256x128xf32>
    %11 = arith.maximumf %9, %10 : vector<256x128xf32>
    %12 = arith.truncf %11 : vector<256x128xf32> to vector<256x128xbf16>
    %c0_11 = arith.constant 0 : index
    %c0_12 = arith.constant 0 : index
    %13 = vector.load %arg6[%c0_11, %c0_12] : memref<128x128xbf16, #tpu.memory_space<vmem>>, vector<128x128xbf16>
    %cst_13 = arith.constant dense<0.000000e+00> : vector<256x128xf32>
    %14 = tpu.matmul %12, %13, %cst_13 {dimension_numbers = #tpu.dot_dimension_numbers<[1], [0], [0], [1], [0, 0, 1, 1], [], []>} : vector<256x128xbf16>, vector<128x128xbf16>, vector<256x128xf32> -> vector<256x128xf32>
    %c0_14 = arith.constant 0 : index
    %c0_15 = arith.constant 0 : index
    %15 = vector.load %arg7[%c0_14, %c0_15] : memref<1x128xf32, #tpu.memory_space<vmem>>, vector<1x128xf32>
    %16 = vector.broadcast %15 : vector<1x128xf32> to vector<256x128xf32>
    %17 = arith.addf %14, %16 : vector<256x128xf32>
    %cst_16 = arith.constant 0.000000e+00 : f32
    %18 = vector.broadcast %cst_16 : f32 to vector<256x128xf32>
    %19 = arith.maximumf %17, %18 : vector<256x128xf32>
    %20 = arith.truncf %19 : vector<256x128xf32> to vector<256x128xbf16>
    %c0_17 = arith.constant 0 : index
    %c0_18 = arith.constant 0 : index
    %21 = vector.load %arg8[%c0_17, %c0_18] : memref<128x16xbf16, #tpu.memory_space<vmem>>, vector<128x16xbf16>
    %cst_19 = arith.constant dense<0.000000e+00> : vector<256x16xf32>
    %22 = tpu.matmul %20, %21, %cst_19 {dimension_numbers = #tpu.dot_dimension_numbers<[1], [0], [0], [1], [0, 0, 1, 1], [], []>} : vector<256x128xbf16>, vector<128x16xbf16>, vector<256x16xf32> -> vector<256x16xf32>
    %c0_20 = arith.constant 0 : index
    %c0_21 = arith.constant 0 : index
    %23 = vector.load %arg9[%c0_20, %c0_21] : memref<1x16xf32, #tpu.memory_space<vmem>>, vector<1x16xf32>
    %24 = vector.broadcast %23 : vector<1x16xf32> to vector<256x16xf32>
    %25 = arith.addf %22, %24 : vector<256x16xf32>
    %26 = arith.negf %25 : vector<256x16xf32>
    %27 = math.exp %26 : vector<256x16xf32>
    %cst_22 = arith.constant 1.000000e+00 : f32
    %28 = vector.broadcast %cst_22 : f32 to vector<256x16xf32>
    %29 = arith.addf %28, %27 : vector<256x16xf32>
    %30 = arith.divf %28, %29 : vector<256x16xf32>
    %c0_23 = arith.constant 0 : index
    %c0_24 = arith.constant 0 : index
    %31 = vector.load %arg10[%c0_23, %c0_24] : memref<256x16xf32, #tpu.memory_space<vmem>>, vector<256x16xf32>
    tpu.vector_store %arg10[%c0_23, %c0_24], %30 {strides = array<i32>} : memref<256x16xf32, #tpu.memory_space<vmem>>, vector<256x16xf32>,
    return
  }
  func.func @transform_0(%arg0: i32) -> (i32, i32) {
    %c0_i32 = arith.constant 0 : i32
    %c0_i32_0 = arith.constant 0 : i32
    return %arg0, %c0_i32 : i32, i32
  }
  func.func @transform_1(%arg0: i32) -> (i32, i32) {
    %c0_i32 = arith.constant 0 : i32
    %c0_i32_0 = arith.constant 0 : i32
    return %arg0, %c0_i32 : i32, i32
  }
  func.func @transform_2(%arg0: i32) -> (i32, i32) {
    %c0_i32 = arith.constant 0 : i32
    %c0_i32_0 = arith.constant 0 : i32
    %c0_i32_1 = arith.constant 0 : i32
    return %c0_i32, %c0_i32_0 : i32, i32
  }
  func.func @transform_3(%arg0: i32) -> (i32, i32) {
    %c0_i32 = arith.constant 0 : i32
    %c0_i32_0 = arith.constant 0 : i32
    %c0_i32_1 = arith.constant 0 : i32
    return %c0_i32, %c0_i32_0 : i32, i32
  }
  func.func @transform_4(%arg0: i32) -> (i32, i32) {
    %c0_i32 = arith.constant 0 : i32
    %c0_i32_0 = arith.constant 0 : i32
    %c0_i32_1 = arith.constant 0 : i32
    return %c0_i32, %c0_i32_0 : i32, i32
  }
  func.func @transform_5(%arg0: i32) -> (i32, i32) {
    %c0_i32 = arith.constant 0 : i32
    %c0_i32_0 = arith.constant 0 : i32
    %c0_i32_1 = arith.constant 0 : i32
    return %c0_i32, %c0_i32_0 : i32, i32
  }
  func.func @transform_6(%arg0: i32) -> (i32, i32) {
    %c0_i32 = arith.constant 0 : i32
    %c0_i32_0 = arith.constant 0 : i32
    %c0_i32_1 = arith.constant 0 : i32
    return %c0_i32, %c0_i32_0 : i32, i32
  }
  func.func @transform_7(%arg0: i32) -> (i32, i32) {
    %c0_i32 = arith.constant 0 : i32
    %c0_i32_0 = arith.constant 0 : i32
    %c0_i32_1 = arith.constant 0 : i32
    return %c0_i32, %c0_i32_0 : i32, i32
  }
  func.func @transform_8(%arg0: i32) -> (i32, i32) {
    %c0_i32 = arith.constant 0 : i32
    %c0_i32_0 = arith.constant 0 : i32
    %c0_i32_1 = arith.constant 0 : i32
    return %c0_i32, %c0_i32_0 : i32, i32
  }
  func.func @transform_9(%arg0: i32) -> (i32, i32) {
    %c0_i32 = arith.constant 0 : i32
    %c0_i32_0 = arith.constant 0 : i32
    return %arg0, %c0_i32 : i32, i32
  }
}

</mosaic_0001>

<llo_original>
// kernel: tpu_custom_call.1
$region0: #{tpu_custom_call.1}
  #allocation0 [shape = 'u32[]', space=smem, size = 0x4, offset = 0x4, fixed_abs, tag = 'smem constant byte address 0x4 - core index']
  #allocation1 [shape = 'u32[144,128]{1,0:T(1,128)}', space=vmem, size = 0x12000, scoped, tag = 'internal scratch']
  %s0 = inlined_call_operand.vmem [shape: bf16[512,16], index: 0, kind: input, shape index: {}]
  %s1 = inlined_call_operand.vmem [shape: bf16[512,8], index: 1, kind: input, shape index: {}]
  %s2 = inlined_call_operand.vmem [shape: bf16[16,128], index: 2, kind: input, shape index: {}]
  %s3 = inlined_call_operand.vmem [shape: bf16[8,128], index: 3, kind: input, shape index: {}]
  %s4 = inlined_call_operand.vmem [shape: f32[1,128], index: 4, kind: input, shape index: {}]
  %s5 = inlined_call_operand.vmem [shape: bf16[128,128], index: 5, kind: input, shape index: {}]
  %s6 = inlined_call_operand.vmem [shape: f32[1,128], index: 6, kind: input, shape index: {}]
  %s7 = inlined_call_operand.vmem [shape: bf16[128,16], index: 7, kind: input, shape index: {}]
  %s8 = inlined_call_operand.vmem [shape: f32[1,16], index: 8, kind: input, shape index: {}]
  %s9 = inlined_call_operand.vmem [shape: f32[512,16], index: 9, kind: output, shape index: {}]
  %s10 = sld [smem:[#allocation0]]
  $region69: #{tpu_custom_call.1} parent=0
    _
  %s12 = ssub.s32 1, %s10
  %s13 = scalar_select 0, %s12, %s10
  loop: start=0, step=1, limit=4
  $region2: #{tpu_custom_call.1} parent=0 // loop_pre_header
    _
  $region3: #{tpu_custom_call.1} parent=0 // loop_header
    %s15 = sphi 0, %s19
    %p16 = scmp.ge.s32.totalorder %s15, 4
    %s25 = sphi 0, %s27
    %s28 = sphi 0, %s25
    %s29 = sphi 0, %s28
    %s45 = sphi 0, %s29
    %s51 = sphi 0, %s53
    %s54 = sphi 0, %s51
    %s55 = sphi 0, %s54
    %s71 = sphi 0, %s55
    %s75 = sphi 0, %s75
    %s77 = sphi 0, %s75
    %s78 = sphi 0, %s77
    %s92 = sphi 0, %s78
    %s96 = sphi 0, %s96
    %s98 = sphi 0, %s96
    %s99 = sphi 0, %s98
    %s113 = sphi 0, %s99
    %s117 = sphi 0, %s117
    %s119 = sphi 0, %s117
    %s120 = sphi 0, %s119
    %s134 = sphi 0, %s120
    %s138 = sphi 0, %s138
    %s140 = sphi 0, %s138
    %s141 = sphi 0, %s140
    %s155 = sphi 0, %s141
    %s159 = sphi 0, %s159
    %s161 = sphi 0, %s159
    %s162 = sphi 0, %s161
    %s176 = sphi 0, %s162
    %s180 = sphi 0, %s180
    %s182 = sphi 0, %s180
    %s183 = sphi 0, %s182
    %s197 = sphi 0, %s183
    %s201 = sphi 0, %s201
    %s203 = sphi 0, %s201
    %s204 = sphi 0, %s203
    %s218 = sphi 0, %s204
    %s224 = sphi 0, %s226
    %s227 = sphi 0, %s224
    %s228 = sphi 0, %s227
    %s244 = sphi 0, %s228
  $region4: #{tpu_custom_call.1} parent=0 // loop_header_branch
    %18 = sbr.rel (%p16) target = $region8
  $region5: #{tpu_custom_call.1} parent=0 // loop_body
    %s20 = ssub.s32 %s15, 1
    %s21 = ssub.s32 %s15, 2
    %s22 = sadd.s32 %s15, 1
    %s23 = ssub.s32 %s15, %s22
    %p24 = scmp.eq.s32.totalorder %s23, 0
    %s26 = sadd.s32 %s25, 1
    %s27 = scalar_select %p24, %s25, %s26
    %p30 = pneg %p24
    %p31 = scmp.eq.s32.totalorder %s15, 1
    %p32 = por %p30, %p31
    %p33 = scmp.ne.s32.totalorder %s25, %s28
    %p34 = scmp.eq.s32.totalorder %s15, 0
    %p35 = por %p33, %p34
    %p36 = scmp.ne.s32.totalorder %s25, %s28
    %p37 = scmp.eq.s32.totalorder %s20, 1
    %p38 = por %p36, %p37
    %p39 = scmp.ne.s32.totalorder %s28, %s29
    %p40 = scmp.eq.s32.totalorder %s20, 0
    %p41 = por %p39, %p40
    %p42 = scmp.ne.s32.totalorder %s28, %s29
    %p43 = scmp.eq.s32.totalorder %s21, 1
    %p44 = por %p42, %p43
    %p46 = scmp.ne.s32.totalorder %s29, %s45
    %p47 = scmp.eq.s32.totalorder %s21, 0
    %p48 = por %p46, %p47
    %s49 = ssub.s32 %s15, %s22
    %p50 = scmp.eq.s32.totalorder %s49, 0
    %s52 = sadd.s32 %s51, 1
    %s53 = scalar_select %p50, %s51, %s52
    %p56 = pneg %p50
    %p57 = scmp.eq.s32.totalorder %s15, 1
    %p58 = por %p56, %p57
    %p59 = scmp.ne.s32.totalorder %s51, %s54
    %p60 = scmp.eq.s32.totalorder %s15, 0
    %p61 = por %p59, %p60
    %p62 = scmp.ne.s32.totalorder %s51, %s54
    %p63 = scmp.eq.s32.totalorder %s20, 1
    %p64 = por %p62, %p63
    %p65 = scmp.ne.s32.totalorder %s54, %s55
    %p66 = scmp.eq.s32.totalorder %s20, 0
    %p67 = por %p65, %p66
    %p68 = scmp.ne.s32.totalorder %s54, %s55
    %p69 = scmp.eq.s32.totalorder %s21, 1
    %p70 = por %p68, %p69
    %p72 = scmp.ne.s32.totalorder %s55, %s71
    %p73 = scmp.eq.s32.totalorder %s21, 0
    %p74 = por %p72, %p73
    %s76 = sadd.s32 %s75, 1
    %p79 = scmp.eq.s32.totalorder %s15, 1
    %p80 = scmp.ne.s32.totalorder %s75, %s77
    %p81 = scmp.eq.s32.totalorder %s15, 0
    %p82 = por %p80, %p81
    %p83 = scmp.ne.s32.totalorder %s75, %s77
    %p84 = scmp.eq.s32.totalorder %s20, 1
    %p85 = por %p83, %p84
    %p86 = scmp.ne.s32.totalorder %s77, %s78
    %p87 = scmp.eq.s32.totalorder %s20, 0
    %p88 = por %p86, %p87
    %p89 = scmp.ne.s32.totalorder %s77, %s78
    %p90 = scmp.eq.s32.totalorder %s21, 1
    %p91 = por %p89, %p90
    %p93 = scmp.ne.s32.totalorder %s78, %s92
    %p94 = scmp.eq.s32.totalorder %s21, 0
    %p95 = por %p93, %p94
    %s97 = sadd.s32 %s96, 1
    %p100 = scmp.eq.s32.totalorder %s15, 1
    %p101 = scmp.ne.s32.totalorder %s96, %s98
    %p102 = scmp.eq.s32.totalorder %s15, 0
    %p103 = por %p101, %p102
    %p104 = scmp.ne.s32.totalorder %s96, %s98
    %p105 = scmp.eq.s32.totalorder %s20, 1
    %p106 = por %p104, %p105
    %p107 = scmp.ne.s32.totalorder %s98, %s99
    %p108 = scmp.eq.s32.totalorder %s20, 0
    %p109 = por %p107, %p108
    %p110 = scmp.ne.s32.totalorder %s98, %s99
    %p111 = scmp.eq.s32.totalorder %s21, 1
    %p112 = por %p110, %p111
    %p114 = scmp.ne.s32.totalorder %s99, %s113
    %p115 = scmp.eq.s32.totalorder %s21, 0
    %p116 = por %p114, %p115
    %s118 = sadd.s32 %s117, 1
    %p121 = scmp.eq.s32.totalorder %s15, 1
    %p122 = scmp.ne.s32.totalorder %s117, %s119
    %p123 = scmp.eq.s32.totalorder %s15, 0
    %p124 = por %p122, %p123
    %p125 = scmp.ne.s32.totalorder %s117, %s119
    %p126 = scmp.eq.s32.totalorder %s20, 1
    %p127 = por %p125, %p126
    %p128 = scmp.ne.s32.totalorder %s119, %s120
    %p129 = scmp.eq.s32.totalorder %s20, 0
    %p130 = por %p128, %p129
    %p131 = scmp.ne.s32.totalorder %s119, %s120
    %p132 = scmp.eq.s32.totalorder %s21, 1
    %p133 = por %p131, %p132
    %p135 = scmp.ne.s32.totalorder %s120, %s134
    %p136 = scmp.eq.s32.totalorder %s21, 0
    %p137 = por %p135, %p136
    %s139 = sadd.s32 %s138, 1
    %p142 = scmp.eq.s32.totalorder %s15, 1
    %p143 = scmp.ne.s32.totalorder %s138, %s140
    %p144 = scmp.eq.s32.totalorder %s15, 0
    %p145 = por %p143, %p144
    %p146 = scmp.ne.s32.totalorder %s138, %s140
    %p147 = scmp.eq.s32.totalorder %s20, 1
    %p148 = por %p146, %p147
    %p149 = scmp.ne.s32.totalorder %s140, %s141
    %p150 = scmp.eq.s32.totalorder %s20, 0
    %p151 = por %p149, %p150
    %p152 = scmp.ne.s32.totalorder %s140, %s141
    %p153 = scmp.eq.s32.totalorder %s21, 1
    %p154 = por %p152, %p153
    %p156 = scmp.ne.s32.totalorder %s141, %s155
    %p157 = scmp.eq.s32.totalorder %s21, 0
    %p158 = por %p156, %p157
    %s160 = sadd.s32 %s159, 1
    %p163 = scmp.eq.s32.totalorder %s15, 1
    %p164 = scmp.ne.s32.totalorder %s159, %s161
    %p165 = scmp.eq.s32.totalorder %s15, 0
    %p166 = por %p164, %p165
    %p167 = scmp.ne.s32.totalorder %s159, %s161
    %p168 = scmp.eq.s32.totalorder %s20, 1
    %p169 = por %p167, %p168
    %p170 = scmp.ne.s32.totalorder %s161, %s162
    %p171 = scmp.eq.s32.totalorder %s20, 0
    %p172 = por %p170, %p171
    %p173 = scmp.ne.s32.totalorder %s161, %s162
    %p174 = scmp.eq.s32.totalorder %s21, 1
    %p175 = por %p173, %p174
    %p177 = scmp.ne.s32.totalorder %s162, %s176
    %p178 = scmp.eq.s32.totalorder %s21, 0
    %p179 = por %p177, %p178
    %s181 = sadd.s32 %s180, 1
    %p184 = scmp.eq.s32.totalorder %s15, 1
    %p185 = scmp.ne.s32.totalorder %s180, %s182
    %p186 = scmp.eq.s32.totalorder %s15, 0
    %p187 = por %p185, %p186
    %p188 = scmp.ne.s32.totalorder %s180, %s182
    %p189 = scmp.eq.s32.totalorder %s20, 1
    %p190 = por %p188, %p189
    %p191 = scmp.ne.s32.totalorder %s182, %s183
    %p192 = scmp.eq.s32.totalorder %s20, 0
    %p193 = por %p191, %p192
    %p194 = scmp.ne.s32.totalorder %s182, %s183
    %p195 = scmp.eq.s32.totalorder %s21, 1
    %p196 = por %p194, %p195
    %p198 = scmp.ne.s32.totalorder %s183, %s197
    %p199 = scmp.eq.s32.totalorder %s21, 0
    %p200 = por %p198, %p199
    %s202 = sadd.s32 %s201, 1
    %p205 = scmp.eq.s32.totalorder %s15, 1
    %p206 = scmp.ne.s32.totalorder %s201, %s203
    %p207 = scmp.eq.s32.totalorder %s15, 0
    %p208 = por %p206, %p207
    %p209 = scmp.ne.s32.totalorder %s201, %s203
    %p210 = scmp.eq.s32.totalorder %s20, 1
    %p211 = por %p209, %p210
    %p212 = scmp.ne.s32.totalorder %s203, %s204
    %p213 = scmp.eq.s32.totalorder %s20, 0
    %p214 = por %p212, %p213
    %p215 = scmp.ne.s32.totalorder %s203, %s204
    %p216 = scmp.eq.s32.totalorder %s21, 1
    %p217 = por %p215, %p216
    %p219 = scmp.ne.s32.totalorder %s204, %s218
    %p220 = scmp.eq.s32.totalorder %s21, 0
    %p221 = por %p219, %p220
    %s222 = ssub.s32 %s15, %s22
    %p223 = scmp.eq.s32.totalorder %s222, 0
    %s225 = sadd.s32 %s224, 1
    %s226 = scalar_select %p223, %s224, %s225
    %p229 = pneg %p223
    %p230 = scmp.eq.s32.totalorder %s15, 1
    %p231 = por %p229, %p230
    %p232 = scmp.ne.s32.totalorder %s224, %s227
    %p233 = scmp.eq.s32.totalorder %s15, 0
    %p234 = por %p232, %p233
    %p235 = scmp.ne.s32.totalorder %s224, %s227
    %p236 = scmp.eq.s32.totalorder %s20, 1
    %p237 = por %p235, %p236
    %p238 = scmp.ne.s32.totalorder %s227, %s228
    %p239 = scmp.eq.s32.totalorder %s20, 0
    %p240 = por %p238, %p239
    %p241 = scmp.ne.s32.totalorder %s227, %s228
    %p242 = scmp.eq.s32.totalorder %s21, 1
    %p243 = por %p241, %p242
    %p245 = scmp.ne.s32.totalorder %s228, %s244
    %p246 = scmp.eq.s32.totalorder %s21, 0
    %p247 = por %p245, %p246
    %p248 = scmp.le.s32.totalorder 1, %s15
    %p249 = scmp.lt.s32.totalorder %s15, 3
    %p250 = pnand %p248, %p249
    %p251 = pneg %p250
    // Predicated region
    $region9: #{tpu_custom_call.1} parent=5 // pred_check
      _
    $region10: #{tpu_custom_call.1} parent=5 // pred_check_branch
      %253 = sbr.rel (%p250) target = $region12
    $region11: #{tpu_custom_call.1} parent=5 // pred_region
      %s254 = ssub.s32 %s15, 1
      // Predicated region
      $region13: #{tpu_custom_call.1} parent=11 // pred_check
        %p255 = pneg %p88
      $region14: #{tpu_custom_call.1} parent=11 // pred_check_branch
        %257 = sbr.rel (%p255) target = $region16
      $region15: #{tpu_custom_call.1} parent=11 // pred_region
        _
      $region16: #{tpu_custom_call.1} parent=11 // pred_fallthru
        _
      // Predicated region
      $region17: #{tpu_custom_call.1} parent=11 // pred_check
        %p258 = pneg %p109
      $region18: #{tpu_custom_call.1} parent=11 // pred_check_branch
        %260 = sbr.rel (%p258) target = $region20
      $region19: #{tpu_custom_call.1} parent=11 // pred_region
        _
      $region20: #{tpu_custom_call.1} parent=11 // pred_fallthru
        _
      // Predicated region
      $region21: #{tpu_custom_call.1} parent=11 // pred_check
        %p261 = pneg %p130
      $region22: #{tpu_custom_call.1} parent=11 // pred_check_branch
        %263 = sbr.rel (%p261) target = $region24
      $region23: #{tpu_custom_call.1} parent=11 // pred_region
        _
      $region24: #{tpu_custom_call.1} parent=11 // pred_fallthru
        _
      // Predicated region
      $region25: #{tpu_custom_call.1} parent=11 // pred_check
        %p264 = pneg %p151
      $region26: #{tpu_custom_call.1} parent=11 // pred_check_branch
        %266 = sbr.rel (%p264) target = $region28
      $region27: #{tpu_custom_call.1} parent=11 // pred_region
        _
      $region28: #{tpu_custom_call.1} parent=11 // pred_fallthru
        _
      // Predicated region
      $region29: #{tpu_custom_call.1} parent=11 // pred_check
        %p267 = pneg %p172
      $region30: #{tpu_custom_call.1} parent=11 // pred_check_branch
        %269 = sbr.rel (%p267) target = $region32
      $region31: #{tpu_custom_call.1} parent=11 // pred_region
        _
      $region32: #{tpu_custom_call.1} parent=11 // pred_fallthru
        _
      // Predicated region
      $region33: #{tpu_custom_call.1} parent=11 // pred_check
        %p270 = pneg %p193
      $region34: #{tpu_custom_call.1} parent=11 // pred_check_branch
        %272 = sbr.rel (%p270) target = $region36
      $region35: #{tpu_custom_call.1} parent=11 // pred_region
        _
      $region36: #{tpu_custom_call.1} parent=11 // pred_fallthru
        _
      // Predicated region
      $region37: #{tpu_custom_call.1} parent=11 // pred_check
        %p273 = pneg %p214
      $region38: #{tpu_custom_call.1} parent=11 // pred_check_branch
        %275 = sbr.rel (%p273) target = $region40
      $region39: #{tpu_custom_call.1} parent=11 // pred_region
        _
      $region40: #{tpu_custom_call.1} parent=11 // pred_fallthru
        _
    $region12: #{tpu_custom_call.1} parent=5 // pred_fallthru
      _
    %p276 = scmp.lt.s32.totalorder %s15, 2
    // Predicated region
    $region41: #{tpu_custom_call.1} parent=5 // pred_check
      %p277 = pneg %p276
    $region42: #{tpu_custom_call.1} parent=5 // pred_check_branch
      %279 = sbr.rel (%p277) target = $region44
    $region43: #{tpu_custom_call.1} parent=5 // pred_region
      // Predicated region
      $region45: #{tpu_custom_call.1} parent=43 // pred_check
        %p280 = pneg %p35
      $region46: #{tpu_custom_call.1} parent=43 // pred_check_branch
        %282 = sbr.rel (%p280) target = $region48
      $region47: #{tpu_custom_call.1} parent=43 // pred_region
        %s283 = smul.u32 32, %s15
        %p284 = scmp.lt.s32.totalorder %s283, 63
        %s285 = scalar_select %p284, %s283, 63
        %s286 = smul.addr %s285, 4
        %s287 = scalar_lea.vmem %s0, %s286
        %s288 = smul.u32 32, %s15
      $region48: #{tpu_custom_call.1} parent=43 // pred_fallthru
        _
      // Predicated region
      $region49: #{tpu_custom_call.1} parent=43 // pred_check
        %p289 = pneg %p61
      $region50: #{tpu_custom_call.1} parent=43 // pred_check_branch
        %291 = sbr.rel (%p289) target = $region52
      $region51: #{tpu_custom_call.1} parent=43 // pred_region
        %s292 = smul.u32 32, %s15
        %p293 = scmp.lt.s32.totalorder %s292, 63
        %s294 = scalar_select %p293, %s292, 63
        %s295 = smul.addr %s294, 4
        %s296 = scalar_lea.vmem %s1, %s295
        %s297 = smul.u32 32, %s15
      $region52: #{tpu_custom_call.1} parent=43 // pred_fallthru
        _
    $region44: #{tpu_custom_call.1} parent=5 // pred_fallthru
      _
    %p298 = scmp.le.s32.totalorder 1, %s15
    %p299 = scmp.lt.s32.totalorder %s15, 3
    %p300 = pnand %p298, %p299
    %p301 = pneg %p300
    // Predicated region
    $region53: #{tpu_custom_call.1} parent=5 // pred_check
      _
    $region54: #{tpu_custom_call.1} parent=5 // pred_check_branch
      %303 = sbr.rel (%p300) target = $region56
    $region55: #{tpu_custom_call.1} parent=5 // pred_region
      %s304 = ssub.s32 %s15, 1
      %s305 = smul.u32 32, %s20
      %p306 = scmp.lt.s32.totalorder %s305, 63
      %s307 = scalar_select %p306, %s305, 63
      %s308 = smul.addr %s307, 4
      %s309 = scalar_lea.vmem %s0, %s308
      %p310 = pneg %p41
      %p311 = pneg %p38
      %s312 = smul.u32 32, %s20
      %p313 = scmp.lt.s32.totalorder %s312, 63
      %s314 = scalar_select %p313, %s312, 63
      %s315 = smul.addr %s314, 4
      %s316 = scalar_lea.vmem %s1, %s315
      %p317 = pneg %p67
      %p318 = pneg %p64
      %p319 = pneg %p88
      %p320 = pneg %p85
      %p321 = pneg %p109
      %p322 = pneg %p106
      %p323 = pneg %p130
      %p324 = pneg %p127
      %p325 = pneg %p151
      %p326 = pneg %p148
      %p327 = pneg %p172
      %p328 = pneg %p169
      %p329 = pneg %p193
      %p330 = pneg %p190
      %p331 = pneg %p214
      %p332 = pneg %p211
      %p333 = pneg %p240
      %p334 = pneg %p237
      %s335 = smul.u32 32, %s20
      %p336 = scmp.lt.s32.totalorder %s335, 63
      %s337 = scalar_select %p336, %s335, 63
      %s338 = smul.addr %s337, 8
      %s339 = scalar_lea.vmem %s9, %s338
      %s340 = smul.u32 32, %s20
      %p341 = scmp.lt.s32.totalorder %s340, 63
      %s342 = scalar_select %p341, %s340, 63
      %s343 = smul.addr %s342, 4
      %s344 = scalar_lea.vmem %s0, %s343
      %s345 = smul.u32 32, %s20
      %s346 = smul.u32 32, %s20
      %p347 = scmp.lt.s32.totalorder %s346, 63
      %s348 = scalar_select %p347, %s346, 63
      %s349 = smul.addr %s348, 4
      %s350 = scalar_lea.vmem %s1, %s349
      %s351 = smul.u32 32, %s20
      %s352 = smul.u32 32, %s20
      %p353 = scmp.lt.s32.totalorder %s352, 63
      %s354 = scalar_select %p353, %s352, 63
      %s355 = smul.addr %s354, 8
      %s356 = scalar_lea.vmem %s9, %s355
      %s357 = smul.u32 32, %s20
      %v359 = vld [vmem:[%s344] sm:$0xf]
      %v360 = vld [vmem:[%s344 + $0x4] sm:$0xf]
      %v361 = vld [vmem:[%s344 + $0x8] sm:$0xf]
      %v362 = vld [vmem:[%s344 + $0xc] sm:$0xf]
      %v363 = vld [vmem:[%s344 + $0x10] sm:$0xf]
      %v364 = vld [vmem:[%s344 + $0x14] sm:$0xf]
      %v365 = vld [vmem:[%s344 + $0x18] sm:$0xf]
      %v366 = vld [vmem:[%s344 + $0x1c] sm:$0xf]
      %v367 = vld [vmem:[%s344 + $0x20] sm:$0xf]
      %v368 = vld [vmem:[%s344 + $0x24] sm:$0xf]
      %v369 = vld [vmem:[%s344 + $0x28] sm:$0xf]
      %v370 = vld [vmem:[%s344 + $0x2c] sm:$0xf]
      %v371 = vld [vmem:[%s344 + $0x30] sm:$0xf]
      %v372 = vld [vmem:[%s344 + $0x34] sm:$0xf]
      %v373 = vld [vmem:[%s344 + $0x38] sm:$0xf]
      %v374 = vld [vmem:[%s344 + $0x3c] sm:$0xf]
      %v375 = vld [vmem:[%s344 + $0x40] sm:$0xf]
      %v376 = vld [vmem:[%s344 + $0x44] sm:$0xf]
      %v377 = vld [vmem:[%s344 + $0x48] sm:$0xf]
      %v378 = vld [vmem:[%s344 + $0x4c] sm:$0xf]
      %v379 = vld [vmem:[%s344 + $0x50] sm:$0xf]
      %v380 = vld [vmem:[%s344 + $0x54] sm:$0xf]
      %v381 = vld [vmem:[%s344 + $0x58] sm:$0xf]
      %v382 = vld [vmem:[%s344 + $0x5c] sm:$0xf]
      %v383 = vld [vmem:[%s344 + $0x60] sm:$0xf]
      %v384 = vld [vmem:[%s344 + $0x64] sm:$0xf]
      %v385 = vld [vmem:[%s344 + $0x68] sm:$0xf]
      %v386 = vld [vmem:[%s344 + $0x6c] sm:$0xf]
      %v387 = vld [vmem:[%s344 + $0x70] sm:$0xf]
      %v388 = vld [vmem:[%s344 + $0x74] sm:$0xf]
      %v389 = vld [vmem:[%s344 + $0x78] sm:$0xf]
      %v390 = vld [vmem:[%s344 + $0x7c] sm:$0xf]
      %v391 = vld [vmem:[%s350] sm:$0xf]
      %v392 = vld [vmem:[%s350 + $0x4] sm:$0xf]
      %v393 = vld [vmem:[%s350 + $0x8] sm:$0xf]
      %v394 = vld [vmem:[%s350 + $0xc] sm:$0xf]
      %v395 = vld [vmem:[%s350 + $0x10] sm:$0xf]
      %v396 = vld [vmem:[%s350 + $0x14] sm:$0xf]
      %v397 = vld [vmem:[%s350 + $0x18] sm:$0xf]
      %v398 = vld [vmem:[%s350 + $0x1c] sm:$0xf]
      %v399 = vld [vmem:[%s350 + $0x20] sm:$0xf]
      %v400 = vld [vmem:[%s350 + $0x24] sm:$0xf]
      %v401 = vld [vmem:[%s350 + $0x28] sm:$0xf]
      %v402 = vld [vmem:[%s350 + $0x2c] sm:$0xf]
      %v403 = vld [vmem:[%s350 + $0x30] sm:$0xf]
      %v404 = vld [vmem:[%s350 + $0x34] sm:$0xf]
      %v405 = vld [vmem:[%s350 + $0x38] sm:$0xf]
      %v406 = vld [vmem:[%s350 + $0x3c] sm:$0xf]
      %v407 = vld [vmem:[%s350 + $0x40] sm:$0xf]
      %v408 = vld [vmem:[%s350 + $0x44] sm:$0xf]
      %v409 = vld [vmem:[%s350 + $0x48] sm:$0xf]
      %v410 = vld [vmem:[%s350 + $0x4c] sm:$0xf]
      %v411 = vld [vmem:[%s350 + $0x50] sm:$0xf]
      %v412 = vld [vmem:[%s350 + $0x54] sm:$0xf]
      %v413 = vld [vmem:[%s350 + $0x58] sm:$0xf]
      %v414 = vld [vmem:[%s350 + $0x5c] sm:$0xf]
      %v415 = vld [vmem:[%s350 + $0x60] sm:$0xf]
      %v416 = vld [vmem:[%s350 + $0x64] sm:$0xf]
      %v417 = vld [vmem:[%s350 + $0x68] sm:$0xf]
      %v418 = vld [vmem:[%s350 + $0x6c] sm:$0xf]
      %v419 = vld [vmem:[%s350 + $0x70] sm:$0xf]
      %v420 = vld [vmem:[%s350 + $0x74] sm:$0xf]
      %v421 = vld [vmem:[%s350 + $0x78] sm:$0xf]
      %v422 = vld [vmem:[%s350 + $0x7c] sm:$0xf]
      %v423 = vld [vmem:[%s2] sm:$0xf]
      %v424 = vld [vmem:[%s2 + $0x4] sm:$0xf]
      %v425 = vld [vmem:[%s3] sm:$0xf]
      %v458 = vunpack.c.l.b16 %v391
      %v459 = vunpack.c.l.b16 %v392
      %v460 = vunpack.c.l.b16 %v393
      %v461 = vunpack.c.l.b16 %v394
      %v462 = vunpack.c.l.b16 %v395
      %v463 = vunpack.c.l.b16 %v396
      %v464 = vunpack.c.l.b16 %v397
      %v465 = vunpack.c.l.b16 %v398
      %v466 = vunpack.c.l.b16 %v399
      %v467 = vunpack.c.l.b16 %v400
      %v468 = vunpack.c.l.b16 %v401
      %v469 = vunpack.c.l.b16 %v402
      %v470 = vunpack.c.l.b16 %v403
      %v471 = vunpack.c.l.b16 %v404
      %v472 = vunpack.c.l.b16 %v405
      %v473 = vunpack.c.l.b16 %v406
      %v474 = vunpack.c.l.b16 %v407
      %v475 = vunpack.c.l.b16 %v408
      %v476 = vunpack.c.l.b16 %v409
      %v477 = vunpack.c.l.b16 %v410
      %v478 = vunpack.c.l.b16 %v411
      %v479 = vunpack.c.l.b16 %v412
      %v480 = vunpack.c.l.b16 %v413
      %v481 = vunpack.c.l.b16 %v414
      %v482 = vunpack.c.l.b16 %v415
      %v483 = vunpack.c.l.b16 %v416
      %v484 = vunpack.c.l.b16 %v417
      %v485 = vunpack.c.l.b16 %v418
      %v486 = vunpack.c.l.b16 %v419
      %v487 = vunpack.c.l.b16 %v420
      %v488 = vunpack.c.l.b16 %v421
      %v489 = vunpack.c.l.b16 %v422
      %v490 = vpack.c.b16 %v459, %v458
      %v491 = vpack.c.b16 %v461, %v460
      %v492 = vpack.c.b16 %v463, %v462
      %v493 = vpack.c.b16 %v465, %v464
      %v494 = vpack.c.b16 %v467, %v466
      %v495 = vpack.c.b16 %v469, %v468
      %v496 = vpack.c.b16 %v471, %v470
      %v497 = vpack.c.b16 %v473, %v472
      %v498 = vpack.c.b16 %v475, %v474
      %v499 = vpack.c.b16 %v477, %v476
      %v500 = vpack.c.b16 %v479, %v478
      %v501 = vpack.c.b16 %v481, %v480
      %v502 = vpack.c.b16 %v483, %v482
      %v503 = vpack.c.b16 %v485, %v484
      %v504 = vpack.c.b16 %v487, %v486
      %v505 = vpack.c.b16 %v489, %v488
      %vm506 = vcmask 64512
      %v508 = vsel %vm506, %v490, 0
      %v511 = vsel %vm506, %v491, 0
      %v514 = vsel %vm506, %v492, 0
      %v517 = vsel %vm506, %v493, 0
      %v520 = vsel %vm506, %v494, 0
      %v523 = vsel %vm506, %v495, 0
      %v526 = vsel %vm506, %v496, 0
      %v529 = vsel %vm506, %v497, 0
      %v532 = vsel %vm506, %v498, 0
      %v535 = vsel %vm506, %v499, 0
      %v538 = vsel %vm506, %v500, 0
      %v541 = vsel %vm506, %v501, 0
      %v544 = vsel %vm506, %v502, 0
      %v547 = vsel %vm506, %v503, 0
      %v550 = vsel %vm506, %v504, 0
      %v553 = vsel %vm506, %v505, 0
      %vm555 = vcmask 1043456
      %v557 = vsel %vm555, %v425, 0
      %559 = vmatprep.subr.bf16.mxu0 0
      %560 = vmatpush1.bf16.msra.mxu0 0
      %561 = vmatprep.subr.bf16.mxu0 0
      %562 = vmatpush1.bf16.msra.mxu0 0
      %563 = vmatprep.subr.bf16.mxu0 0
      %564 = vmatpush1.bf16.msra.mxu0 0
      %565 = vmatprep.subr.bf16.mxu0 0
      %566 = vmatpush1.bf16.msra.mxu0 0
      %567 = vmatprep.subr.bf16.mxu0 0
      %568 = vmatpush1.bf16.msra.mxu0 0
      %569 = vmatprep.subr.bf16.mxu0 0
      %570 = vmatpush1.bf16.msra.mxu0 0
      %571 = vmatprep.subr.bf16.mxu0 0
      %572 = vmatpush1.bf16.msra.mxu0 0
      %573 = vmatprep.subr.bf16.mxu0 0
      %574 = vmatpush1.bf16.msra.mxu0 %v557
      %575 = vmatprep.subr.bf16.mxu0 0
      %576 = vmatpush2.bf16.msra.mxu0 0
      %577 = vmatprep.subr.bf16.mxu0 0
      %578 = vmatpush2.bf16.msra.mxu0 0
      %579 = vmatprep.subr.bf16.mxu0 0
      %580 = vmatpush2.bf16.msra.mxu0 0
      %581 = vmatprep.subr.bf16.mxu0 0
      %582 = vmatpush2.bf16.msra.mxu0 0
      %583 = vmatprep.subr.bf16.mxu0 0
      %584 = vmatpush2.bf16.msra.mxu0 0
      %585 = vmatprep.subr.bf16.mxu0 0
      %586 = vmatpush2.bf16.msra.mxu0 0
      %587 = vmatprep.subr.bf16.mxu0 0
      %588 = vmatpush2.bf16.msra.mxu0 0
      %589 = vmatprep.subr.bf16.mxu0 0
      %590 = vmatpush2.bf16.msra.mxu0 0
      %591 = vmatprep.mubr.bf16.mxu0 0
      %592 = vmatmul.mubr.bf16.gmra.mxu0 %v508
      %v593 = vpop.f32.mrf.mxu0
      %v594 = vadd.f32 0.0, %v593
      %v595 = vpop.f32.mrf.mxu0
      %v596 = vpop.f32.mrf.mxu0
      %v597 = vadd.f32 0.0, %v596
      %v598 = vpop.f32.mrf.mxu0
      %599 = vmatprep.mubr.bf16.mxu0 0
      %600 = vmatmul.mubr.bf16.gmra.mxu0 %v511
      %v601 = vpop.f32.mrf.mxu0
      %v602 = vadd.f32 0.0, %v601
      %v603 = vpop.f32.mrf.mxu0
      %v604 = vpop.f32.mrf.mxu0
      %v605 = vadd.f32 0.0, %v604
      %v606 = vpop.f32.mrf.mxu0
      %607 = vmatprep.mubr.bf16.mxu0 0
      %608 = vmatmul.mubr.bf16.gmra.mxu0 %v514
      %v609 = vpop.f32.mrf.mxu0
      %v610 = vadd.f32 0.0, %v609
      %v611 = vpop.f32.mrf.mxu0
      %v612 = vpop.f32.mrf.mxu0
      %v613 = vadd.f32 0.0, %v612
      %v614 = vpop.f32.mrf.mxu0
      %615 = vmatprep.mubr.bf16.mxu0 0
      %616 = vmatmul.mubr.bf16.gmra.mxu0 %v517
      %v617 = vpop.f32.mrf.mxu0
      %v618 = vadd.f32 0.0, %v617
      %v619 = vpop.f32.mrf.mxu0
      %v620 = vpop.f32.mrf.mxu0
      %v621 = vadd.f32 0.0, %v620
      %v622 = vpop.f32.mrf.mxu0
      %623 = vmatprep.mubr.bf16.mxu0 0
      %624 = vmatmul.mubr.bf16.gmra.mxu0 %v520
      %v625 = vpop.f32.mrf.mxu0
      %v626 = vadd.f32 0.0, %v625
      %v627 = vpop.f32.mrf.mxu0
      %v628 = vpop.f32.mrf.mxu0
      %v629 = vadd.f32 0.0, %v628
      %v630 = vpop.f32.mrf.mxu0
      %631 = vmatprep.mubr.bf16.mxu0 0
      %632 = vmatmul.mubr.bf16.gmra.mxu0 %v523
      %v633 = vpop.f32.mrf.mxu0
      %v634 = vadd.f32 0.0, %v633
      %v635 = vpop.f32.mrf.mxu0
      %v636 = vpop.f32.mrf.mxu0
      %v637 = vadd.f32 0.0, %v636
      %v638 = vpop.f32.mrf.mxu0
      %639 = vmatprep.mubr.bf16.mxu0 0
      %640 = vmatmul.mubr.bf16.gmra.mxu0 %v526
      %v641 = vpop.f32.mrf.mxu0
      %v642 = vadd.f32 0.0, %v641
      %v643 = vpop.f32.mrf.mxu0
      %v644 = vpop.f32.mrf.mxu0
      %v645 = vadd.f32 0.0, %v644
      %v646 = vpop.f32.mrf.mxu0
      %647 = vmatprep.mubr.bf16.mxu0 0
      %648 = vmatmul.mubr.bf16.gmra.mxu0 %v529
      %v649 = vpop.f32.mrf.mxu0
      %v650 = vadd.f32 0.0, %v649
      %v651 = vpop.f32.mrf.mxu0
      %v652 = vpop.f32.mrf.mxu0
      %v653 = vadd.f32 0.0, %v652
      %v654 = vpop.f32.mrf.mxu0
      %655 = vmatprep.mubr.bf16.mxu0 0
      %656 = vmatmul.mubr.bf16.gmra.mxu0 %v532
      %v657 = vpop.f32.mrf.mxu0
      %v658 = vadd.f32 0.0, %v657
      %v659 = vpop.f32.mrf.mxu0
      %v660 = vpop.f32.mrf.mxu0
      %v661 = vadd.f32 0.0, %v660
      %v662 = vpop.f32.mrf.mxu0
      %663 = vmatprep.mubr.bf16.mxu0 0
      %664 = vmatmul.mubr.bf16.gmra.mxu0 %v535
      %v665 = vpop.f32.mrf.mxu0
      %v666 = vadd.f32 0.0, %v665
      %v667 = vpop.f32.mrf.mxu0
      %v668 = vpop.f32.mrf.mxu0
      %v669 = vadd.f32 0.0, %v668
      %v670 = vpop.f32.mrf.mxu0
      %671 = vmatprep.mubr.bf16.mxu0 0
      %672 = vmatmul.mubr.bf16.gmra.mxu0 %v538
      %v673 = vpop.f32.mrf.mxu0
      %v674 = vadd.f32 0.0, %v673
      %v675 = vpop.f32.mrf.mxu0
      %v676 = vpop.f32.mrf.mxu0
      %v677 = vadd.f32 0.0, %v676
      %v678 = vpop.f32.mrf.mxu0
      %679 = vmatprep.mubr.bf16.mxu0 0
      %680 = vmatmul.mubr.bf16.gmra.mxu0 %v541
      %v681 = vpop.f32.mrf.mxu0
      %v682 = vadd.f32 0.0, %v681
      %v683 = vpop.f32.mrf.mxu0
      %v684 = vpop.f32.mrf.mxu0
      %v685 = vadd.f32 0.0, %v684
      %v686 = vpop.f32.mrf.mxu0
      %687 = vmatprep.mubr.bf16.mxu0 0
      %688 = vmatmul.mubr.bf16.gmra.mxu0 %v544
      %v689 = vpop.f32.mrf.mxu0
      %v690 = vadd.f32 0.0, %v689
      %v691 = vpop.f32.mrf.mxu0
      %v692 = vpop.f32.mrf.mxu0
      %v693 = vadd.f32 0.0, %v692
      %v694 = vpop.f32.mrf.mxu0
      %695 = vmatprep.mubr.bf16.mxu0 0
      %696 = vmatmul.mubr.bf16.gmra.mxu0 %v547
      %v697 = vpop.f32.mrf.mxu0
      %v698 = vadd.f32 0.0, %v697
      %v699 = vpop.f32.mrf.mxu0
      %v700 = vpop.f32.mrf.mxu0
      %v701 = vadd.f32 0.0, %v700
      %v702 = vpop.f32.mrf.mxu0
      %703 = vmatprep.mubr.bf16.mxu0 0
      %704 = vmatmul.mubr.bf16.gmra.mxu0 %v550
      %v705 = vpop.f32.mrf.mxu0
      %v706 = vadd.f32 0.0, %v705
      %v707 = vpop.f32.mrf.mxu0
      %v708 = vpop.f32.mrf.mxu0
      %v709 = vadd.f32 0.0, %v708
      %v710 = vpop.f32.mrf.mxu0
      %711 = vmatprep.mubr.bf16.mxu0 0
      %712 = vmatmul.mubr.bf16.gmra.mxu0 %v553
      %v713 = vpop.f32.mrf.mxu0
      %v714 = vadd.f32 0.0, %v713
      %v715 = vpop.f32.mrf.mxu0
      %v716 = vpop.f32.mrf.mxu0
      %v717 = vadd.f32 0.0, %v716
      %v718 = vpop.f32.mrf.mxu0
      %719 = vdwg.mxu0
      %v752 = vunpack.c.l.b16 %v359
      %v753 = vunpack.c.l.b16 %v360
      %v754 = vunpack.c.l.b16 %v361
      %v755 = vunpack.c.l.b16 %v362
      %v756 = vunpack.c.l.b16 %v363
      %v757 = vunpack.c.l.b16 %v364
      %v758 = vunpack.c.l.b16 %v365
      %v759 = vunpack.c.l.b16 %v366
      %v760 = vunpack.c.l.b16 %v367
      %v761 = vunpack.c.l.b16 %v368
      %v762 = vunpack.c.l.b16 %v369
      %v763 = vunpack.c.l.b16 %v370
      %v764 = vunpack.c.l.b16 %v371
      %v765 = vunpack.c.l.b16 %v372
      %v766 = vunpack.c.l.b16 %v373
      %v767 = vunpack.c.l.b16 %v374
      %v768 = vunpack.c.l.b16 %v375
      %v769 = vunpack.c.l.b16 %v376
      %v770 = vunpack.c.l.b16 %v377
      %v771 = vunpack.c.l.b16 %v378
      %v772 = vunpack.c.l.b16 %v379
      %v773 = vunpack.c.l.b16 %v380
      %v774 = vunpack.c.l.b16 %v381
      %v775 = vunpack.c.l.b16 %v382
      %v776 = vunpack.c.l.b16 %v383
      %v777 = vunpack.c.l.b16 %v384
      %v778 = vunpack.c.l.b16 %v385
      %v779 = vunpack.c.l.b16 %v386
      %v780 = vunpack.c.l.b16 %v387
      %v781 = vunpack.c.l.b16 %v388
      %v782 = vunpack.c.l.b16 %v389
      %v783 = vunpack.c.l.b16 %v390
      %v784 = vpack.c.b16 %v753, %v752
      %v785 = vpack.c.b16 %v755, %v754
      %v786 = vpack.c.b16 %v757, %v756
      %v787 = vpack.c.b16 %v759, %v758
      %v788 = vpack.c.b16 %v761, %v760
      %v789 = vpack.c.b16 %v763, %v762
      %v790 = vpack.c.b16 %v765, %v764
      %v791 = vpack.c.b16 %v767, %v766
      %v792 = vpack.c.b16 %v769, %v768
      %v793 = vpack.c.b16 %v771, %v770
      %v794 = vpack.c.b16 %v773, %v772
      %v795 = vpack.c.b16 %v775, %v774
      %v796 = vpack.c.b16 %v777, %v776
      %v797 = vpack.c.b16 %v779, %v778
      %v798 = vpack.c.b16 %v781, %v780
      %v799 = vpack.c.b16 %v783, %v782
      %v802 = vunpack.c.l.b16 %v423
      %v803 = vunpack.c.l.b16 %v424
      %v804 = vpack.c.b16 %v803, %v802
      %vm806 = vcmask 130048
      %v808 = vsel %vm806, %v784, 0
      %v811 = vsel %vm806, %v785, 0
      %v814 = vsel %vm806, %v786, 0
      %v817 = vsel %vm806, %v787, 0
      %v820 = vsel %vm806, %v788, 0
      %v823 = vsel %vm806, %v789, 0
      %v826 = vsel %vm806, %v790, 0
      %v829 = vsel %vm806, %v791, 0
      %v832 = vsel %vm806, %v792, 0
      %v835 = vsel %vm806, %v793, 0
      %v838 = vsel %vm806, %v794, 0
      %v841 = vsel %vm806, %v795, 0
      %v844 = vsel %vm806, %v796, 0
      %v847 = vsel %vm806, %v797, 0
      %v850 = vsel %vm806, %v798, 0
      %v853 = vsel %vm806, %v799, 0
      %855 = vmatprep.subr.bf16.mxu0 0
      %856 = vmatpush1.bf16.msra.mxu0 0
      %857 = vmatprep.subr.bf16.mxu0 0
      %858 = vmatpush1.bf16.msra.mxu0 0
      %859 = vmatprep.subr.bf16.mxu0 0
      %860 = vmatpush1.bf16.msra.mxu0 0
      %861 = vmatprep.subr.bf16.mxu0 0
      %862 = vmatpush1.bf16.msra.mxu0 0
      %863 = vmatprep.subr.bf16.mxu0 0
      %864 = vmatpush1.bf16.msra.mxu0 0
      %865 = vmatprep.subr.bf16.mxu0 0
      %866 = vmatpush1.bf16.msra.mxu0 0
      %867 = vmatprep.subr.bf16.mxu0 0
      %868 = vmatpush1.bf16.msra.mxu0 0
      %869 = vmatprep.subr.bf16.mxu0 0
      %870 = vmatpush1.bf16.msra.mxu0 %v804
      %871 = vmatprep.subr.bf16.mxu0 0
      %872 = vmatpush2.bf16.msra.mxu0 0
      %873 = vmatprep.subr.bf16.mxu0 0
      %874 = vmatpush2.bf16.msra.mxu0 0
      %875 = vmatprep.subr.bf16.mxu0 0
      %876 = vmatpush2.bf16.msra.mxu0 0
      %877 = vmatprep.subr.bf16.mxu0 0
      %878 = vmatpush2.bf16.msra.mxu0 0
      %879 = vmatprep.subr.bf16.mxu0 0
      %880 = vmatpush2.bf16.msra.mxu0 0
      %881 = vmatprep.subr.bf16.mxu0 0
      %882 = vmatpush2.bf16.msra.mxu0 0
      %883 = vmatprep.subr.bf16.mxu0 0
      %884 = vmatpush2.bf16.msra.mxu0 0
      %885 = vmatprep.subr.bf16.mxu0 0
      %886 = vmatpush2.bf16.msra.mxu0 0
      %887 = vmatprep.mubr.bf16.mxu0 0
      %888 = vmatmul.mubr.bf16.gmra.mxu0 %v808
      %v889 = vpop.f32.mrf.mxu0
      %v890 = vadd.f32 %v594, %v889
      %v891 = vpop.f32.mrf.mxu0
      %v892 = vpop.f32.mrf.mxu0
      %v893 = vadd.f32 %v597, %v892
      %v894 = vpop.f32.mrf.mxu0
      %895 = vmatprep.mubr.bf16.mxu0 0
      %896 = vmatmul.mubr.bf16.gmra.mxu0 %v811
      %v897 = vpop.f32.mrf.mxu0
      %v898 = vadd.f32 %v602, %v897
      %v899 = vpop.f32.mrf.mxu0
      %v900 = vpop.f32.mrf.mxu0
      %v901 = vadd.f32 %v605, %v900
      %v902 = vpop.f32.mrf.mxu0
      %903 = vmatprep.mubr.bf16.mxu0 0
      %904 = vmatmul.mubr.bf16.gmra.mxu0 %v814
      %v905 = vpop.f32.mrf.mxu0
      %v906 = vadd.f32 %v610, %v905
      %v907 = vpop.f32.mrf.mxu0
      %v908 = vpop.f32.mrf.mxu0
      %v909 = vadd.f32 %v613, %v908
      %v910 = vpop.f32.mrf.mxu0
      %911 = vmatprep.mubr.bf16.mxu0 0
      %912 = vmatmul.mubr.bf16.gmra.mxu0 %v817
      %v913 = vpop.f32.mrf.mxu0
      %v914 = vadd.f32 %v618, %v913
      %v915 = vpop.f32.mrf.mxu0
      %v916 = vpop.f32.mrf.mxu0
      %v917 = vadd.f32 %v621, %v916
      %v918 = vpop.f32.mrf.mxu0
      %919 = vmatprep.mubr.bf16.mxu0 0
      %920 = vmatmul.mubr.bf16.gmra.mxu0 %v820
      %v921 = vpop.f32.mrf.mxu0
      %v922 = vadd.f32 %v626, %v921
      %v923 = vpop.f32.mrf.mxu0
      %v924 = vpop.f32.mrf.mxu0
      %v925 = vadd.f32 %v629, %v924
      %v926 = vpop.f32.mrf.mxu0
      %927 = vmatprep.mubr.bf16.mxu0 0
      %928 = vmatmul.mubr.bf16.gmra.mxu0 %v823
      %v929 = vpop.f32.mrf.mxu0
      %v930 = vadd.f32 %v634, %v929
      %v931 = vpop.f32.mrf.mxu0
      %v932 = vpop.f32.mrf.mxu0
      %v933 = vadd.f32 %v637, %v932
      %v934 = vpop.f32.mrf.mxu0
      %935 = vmatprep.mubr.bf16.mxu0 0
      %936 = vmatmul.mubr.bf16.gmra.mxu0 %v826
      %v937 = vpop.f32.mrf.mxu0
      %v938 = vadd.f32 %v642, %v937
      %v939 = vpop.f32.mrf.mxu0
      %v940 = vpop.f32.mrf.mxu0
      %v941 = vadd.f32 %v645, %v940
      %v942 = vpop.f32.mrf.mxu0
      %943 = vmatprep.mubr.bf16.mxu0 0
      %944 = vmatmul.mubr.bf16.gmra.mxu0 %v829
      %v945 = vpop.f32.mrf.mxu0
      %v946 = vadd.f32 %v650, %v945
      %v947 = vpop.f32.mrf.mxu0
      %v948 = vpop.f32.mrf.mxu0
      %v949 = vadd.f32 %v653, %v948
      %v950 = vpop.f32.mrf.mxu0
      %951 = vmatprep.mubr.bf16.mxu0 0
      %952 = vmatmul.mubr.bf16.gmra.mxu0 %v832
      %v953 = vpop.f32.mrf.mxu0
      %v954 = vadd.f32 %v658, %v953
      %v955 = vpop.f32.mrf.mxu0
      %v956 = vpop.f32.mrf.mxu0
      %v957 = vadd.f32 %v661, %v956
      %v958 = vpop.f32.mrf.mxu0
      %959 = vmatprep.mubr.bf16.mxu0 0
      %960 = vmatmul.mubr.bf16.gmra.mxu0 %v835
      %v961 = vpop.f32.mrf.mxu0
      %v962 = vadd.f32 %v666, %v961
      %v963 = vpop.f32.mrf.mxu0
      %v964 = vpop.f32.mrf.mxu0
      %v965 = vadd.f32 %v669, %v964
      %v966 = vpop.f32.mrf.mxu0
      %967 = vmatprep.mubr.bf16.mxu0 0
      %968 = vmatmul.mubr.bf16.gmra.mxu0 %v838
      %v969 = vpop.f32.mrf.mxu0
      %v970 = vadd.f32 %v674, %v969
      %v971 = vpop.f32.mrf.mxu0
      %v972 = vpop.f32.mrf.mxu0
      %v973 = vadd.f32 %v677, %v972
      %v974 = vpop.f32.mrf.mxu0
      %975 = vmatprep.mubr.bf16.mxu0 0
      %976 = vmatmul.mubr.bf16.gmra.mxu0 %v841
      %v977 = vpop.f32.mrf.mxu0
      %v978 = vadd.f32 %v682, %v977
      %v979 = vpop.f32.mrf.mxu0
      %v980 = vpop.f32.mrf.mxu0
      %v981 = vadd.f32 %v685, %v980
      %v982 = vpop.f32.mrf.mxu0
      %983 = vmatprep.mubr.bf16.mxu0 0
      %984 = vmatmul.mubr.bf16.gmra.mxu0 %v844
      %v985 = vpop.f32.mrf.mxu0
      %v986 = vadd.f32 %v690, %v985
      %v987 = vpop.f32.mrf.mxu0
      %v988 = vpop.f32.mrf.mxu0
      %v989 = vadd.f32 %v693, %v988
      %v990 = vpop.f32.mrf.mxu0
      %991 = vmatprep.mubr.bf16.mxu0 0
      %992 = vmatmul.mubr.bf16.gmra.mxu0 %v847
      %v993 = vpop.f32.mrf.mxu0
      %v994 = vadd.f32 %v698, %v993
      %v995 = vpop.f32.mrf.mxu0
      %v996 = vpop.f32.mrf.mxu0
      %v997 = vadd.f32 %v701, %v996
      %v998 = vpop.f32.mrf.mxu0
      %999 = vmatprep.mubr.bf16.mxu0 0
      %1000 = vmatmul.mubr.bf16.gmra.mxu0 %v850
      %v1001 = vpop.f32.mrf.mxu0
      %v1002 = vadd.f32 %v706, %v1001
      %v1003 = vpop.f32.mrf.mxu0
      %v1004 = vpop.f32.mrf.mxu0
      %v1005 = vadd.f32 %v709, %v1004
      %v1006 = vpop.f32.mrf.mxu0
      %1007 = vmatprep.mubr.bf16.mxu0 0
      %1008 = vmatmul.mubr.bf16.gmra.mxu0 %v853
      %v1009 = vpop.f32.mrf.mxu0
      %v1010 = vadd.f32 %v714, %v1009
      %v1011 = vpop.f32.mrf.mxu0
      %v1012 = vpop.f32.mrf.mxu0
      %v1013 = vadd.f32 %v717, %v1012
      %v1014 = vpop.f32.mrf.mxu0
      %1015 = vdwg.mxu0
      %v1016 = vld [vmem:[%s4] sm:$0x1]
      %v1018 = vlaneseq
      %v1019 = vshrl.u32 %v1018, 7
      %v1020 = vsub.s32 0, %v1019
      %v1021 = vrot.slane %v1016, %v1020
      %v1023 = vadd.f32 %v890, %v1021
      %v1024 = vadd.f32 %v893, %v1021
      %v1025 = vadd.f32 %v898, %v1021
      %v1026 = vadd.f32 %v901, %v1021
      %v1027 = vadd.f32 %v906, %v1021
      %v1028 = vadd.f32 %v909, %v1021
      %v1029 = vadd.f32 %v914, %v1021
      %v1030 = vadd.f32 %v917, %v1021
      %v1031 = vadd.f32 %v922, %v1021
      %v1032 = vadd.f32 %v925, %v1021
      %v1033 = vadd.f32 %v930, %v1021
      %v1034 = vadd.f32 %v933, %v1021
      %v1035 = vadd.f32 %v938, %v1021
      %v1036 = vadd.f32 %v941, %v1021
      %v1037 = vadd.f32 %v946, %v1021
      %v1038 = vadd.f32 %v949, %v1021
      %v1039 = vadd.f32 %v954, %v1021
      %v1040 = vadd.f32 %v957, %v1021
      %v1041 = vadd.f32 %v962, %v1021
      %v1042 = vadd.f32 %v965, %v1021
      %v1043 = vadd.f32 %v970, %v1021
      %v1044 = vadd.f32 %v973, %v1021
      %v1045 = vadd.f32 %v978, %v1021
      %v1046 = vadd.f32 %v981, %v1021
      %v1047 = vadd.f32 %v986, %v1021
      %v1048 = vadd.f32 %v989, %v1021
      %v1049 = vadd.f32 %v994, %v1021
      %v1050 = vadd.f32 %v997, %v1021
      %v1051 = vadd.f32 %v1002, %v1021
      %v1052 = vadd.f32 %v1005, %v1021
      %v1053 = vadd.f32 %v1010, %v1021
      %v1054 = vadd.f32 %v1013, %v1021
      %v1055 = vmax.f32 %v1023, 0.0
      %v1056 = vmax.f32 %v1024, 0.0
      %v1057 = vmax.f32 %v1025, 0.0
      %v1058 = vmax.f32 %v1026, 0.0
      %v1059 = vmax.f32 %v1027, 0.0
      %v1060 = vmax.f32 %v1028, 0.0
      %v1061 = vmax.f32 %v1029, 0.0
      %v1062 = vmax.f32 %v1030, 0.0
      %v1063 = vmax.f32 %v1031, 0.0
      %v1064 = vmax.f32 %v1032, 0.0
      %v1065 = vmax.f32 %v1033, 0.0
      %v1066 = vmax.f32 %v1034, 0.0
      %v1067 = vmax.f32 %v1035, 0.0
      %v1068 = vmax.f32 %v1036, 0.0
      %v1069 = vmax.f32 %v1037, 0.0
      %v1070 = vmax.f32 %v1038, 0.0
      %v1071 = vmax.f32 %v1039, 0.0
      %v1072 = vmax.f32 %v1040, 0.0
      %v1073 = vmax.f32 %v1041, 0.0
      %v1074 = vmax.f32 %v1042, 0.0
      %v1075 = vmax.f32 %v1043, 0.0
      %v1076 = vmax.f32 %v1044, 0.0
      %v1077 = vmax.f32 %v1045, 0.0
      %v1078 = vmax.f32 %v1046, 0.0
      %v1079 = vmax.f32 %v1047, 0.0
      %v1080 = vmax.f32 %v1048, 0.0
      %v1081 = vmax.f32 %v1049, 0.0
      %v1082 = vmax.f32 %v1050, 0.0
      %v1083 = vmax.f32 %v1051, 0.0
      %v1084 = vmax.f32 %v1052, 0.0
      %v1085 = vmax.f32 %v1053, 0.0
      %v1086 = vmax.f32 %v1054, 0.0
      %v1087 = vpack.c.bf16 %v1056, %v1055
      %v1088 = vpack.c.bf16 %v1058, %v1057
      %v1089 = vpack.c.bf16 %v1060, %v1059
      %v1090 = vpack.c.bf16 %v1062, %v1061
      %v1091 = vpack.c.bf16 %v1064, %v1063
      %v1092 = vpack.c.bf16 %v1066, %v1065
      %v1093 = vpack.c.bf16 %v1068, %v1067
      %v1094 = vpack.c.bf16 %v1070, %v1069
      %v1095 = vpack.c.bf16 %v1072, %v1071
      %v1096 = vpack.c.bf16 %v1074, %v1073
      %v1097 = vpack.c.bf16 %v1076, %v1075
      %v1098 = vpack.c.bf16 %v1078, %v1077
      %v1099 = vpack.c.bf16 %v1080, %v1079
      %v1100 = vpack.c.bf16 %v1082, %v1081
      %v1101 = vpack.c.bf16 %v1084, %v1083
      %v1102 = vpack.c.bf16 %v1086, %v1085
      %v1103 = vld [vmem:[%s5] sm:$0xf]
      %v1104 = vld [vmem:[%s5 + $0x4] sm:$0xf]
      %v1105 = vld [vmem:[%s5 + $0x8] sm:$0xf]
      %v1106 = vld [vmem:[%s5 + $0xc] sm:$0xf]
      %v1107 = vld [vmem:[%s5 + $0x10] sm:$0xf]
      %v1108 = vld [vmem:[%s5 + $0x14] sm:$0xf]
      %v1109 = vld [vmem:[%s5 + $0x18] sm:$0xf]
      %v1110 = vld [vmem:[%s5 + $0x1c] sm:$0xf]
      %v1111 = vld [vmem:[%s5 + $0x20] sm:$0xf]
      %v1112 = vld [vmem:[%s5 + $0x24] sm:$0xf]
      %v1113 = vld [vmem:[%s5 + $0x28] sm:$0xf]
      %v1114 = vld [vmem:[%s5 + $0x2c] sm:$0xf]
      %v1115 = vld [vmem:[%s5 + $0x30] sm:$0xf]
      %v1116 = vld [vmem:[%s5 + $0x34] sm:$0xf]
      %v1117 = vld [vmem:[%s5 + $0x38] sm:$0xf]
      %v1118 = vld [vmem:[%s5 + $0x3c] sm:$0xf]
      %v1119 = vld [vmem:[%s6] sm:$0x1]
      %v1121 = vlaneseq
      %v1122 = vshrl.u32 %v1121, 7
      %v1123 = vsub.s32 0, %v1122
      %v1124 = vrot.slane %v1119, %v1123
      %v1142 = vunpack.c.l.b16 %v1103
      %v1143 = vunpack.c.l.b16 %v1104
      %v1144 = vunpack.c.l.b16 %v1105
      %v1145 = vunpack.c.l.b16 %v1106
      %v1146 = vunpack.c.l.b16 %v1107
      %v1147 = vunpack.c.l.b16 %v1108
      %v1148 = vunpack.c.l.b16 %v1109
      %v1149 = vunpack.c.l.b16 %v1110
      %v1150 = vunpack.c.l.b16 %v1111
      %v1151 = vunpack.c.l.b16 %v1112
      %v1152 = vunpack.c.l.b16 %v1113
      %v1153 = vunpack.c.l.b16 %v1114
      %v1154 = vunpack.c.l.b16 %v1115
      %v1155 = vunpack.c.l.b16 %v1116
      %v1156 = vunpack.c.l.b16 %v1117
      %v1157 = vunpack.c.l.b16 %v1118
      %v1158 = vpack.c.b16 %v1143, %v1142
      %v1159 = vpack.c.b16 %v1145, %v1144
      %v1160 = vpack.c.b16 %v1147, %v1146
      %v1161 = vpack.c.b16 %v1149, %v1148
      %v1162 = vpack.c.b16 %v1151, %v1150
      %v1163 = vpack.c.b16 %v1153, %v1152
      %v1164 = vpack.c.b16 %v1155, %v1154
      %v1165 = vpack.c.b16 %v1157, %v1156
      %1174 = vmatprep.subr.bf16.mxu0 0
      %1175 = vmatpush1.bf16.msra.mxu0 %v1165
      %1176 = vmatprep.subr.bf16.mxu0 0
      %1177 = vmatpush1.bf16.msra.mxu0 %v1164
      %1178 = vmatprep.subr.bf16.mxu0 0
      %1179 = vmatpush1.bf16.msra.mxu0 %v1163
      %1180 = vmatprep.subr.bf16.mxu0 0
      %1181 = vmatpush1.bf16.msra.mxu0 %v1162
      %1182 = vmatprep.subr.bf16.mxu0 0
      %1183 = vmatpush1.bf16.msra.mxu0 %v1161
      %1184 = vmatprep.subr.bf16.mxu0 0
      %1185 = vmatpush1.bf16.msra.mxu0 %v1160
      %1186 = vmatprep.subr.bf16.mxu0 0
      %1187 = vmatpush1.bf16.msra.mxu0 %v1159
      %1188 = vmatprep.subr.bf16.mxu0 0
      %1189 = vmatpush1.bf16.msra.mxu0 %v1158
      %1190 = vmatprep.subr.bf16.mxu0 0
      %1191 = vmatpush2.bf16.msra.mxu0 0
      %1192 = vmatprep.subr.bf16.mxu0 0
      %1193 = vmatpush2.bf16.msra.mxu0 0
      %1194 = vmatprep.subr.bf16.mxu0 0
      %1195 = vmatpush2.bf16.msra.mxu0 0
      %1196 = vmatprep.subr.bf16.mxu0 0
      %1197 = vmatpush2.bf16.msra.mxu0 0
      %1198 = vmatprep.subr.bf16.mxu0 0
      %1199 = vmatpush2.bf16.msra.mxu0 0
      %1200 = vmatprep.subr.bf16.mxu0 0
      %1201 = vmatpush2.bf16.msra.mxu0 0
      %1202 = vmatprep.subr.bf16.mxu0 0
      %1203 = vmatpush2.bf16.msra.mxu0 0
      %1204 = vmatprep.subr.bf16.mxu0 0
      %1205 = vmatpush2.bf16.msra.mxu0 0
      %1206 = vmatprep.mubr.bf16.mxu0 0
      %1207 = vmatmul.mubr.bf16.gmra.mxu0 %v1087
      %v1208 = vpop.f32.mrf.mxu0
      %v1209 = vadd.f32 %v1124, %v1208
      %v1210 = vpop.f32.mrf.mxu0
      %v1211 = vpop.f32.mrf.mxu0
      %v1212 = vadd.f32 %v1124, %v1211
      %v1213 = vpop.f32.mrf.mxu0
      %1214 = vmatprep.mubr.bf16.mxu0 0
      %1215 = vmatmul.mubr.bf16.gmra.mxu0 %v1088
      %v1216 = vpop.f32.mrf.mxu0
      %v1217 = vadd.f32 %v1124, %v1216
      %v1218 = vpop.f32.mrf.mxu0
      %v1219 = vpop.f32.mrf.mxu0
      %v1220 = vadd.f32 %v1124, %v1219
      %v1221 = vpop.f32.mrf.mxu0
      %1222 = vmatprep.mubr.bf16.mxu0 0
      %1223 = vmatmul.mubr.bf16.gmra.mxu0 %v1089
      %v1224 = vpop.f32.mrf.mxu0
      %v1225 = vadd.f32 %v1124, %v1224
      %v1226 = vpop.f32.mrf.mxu0
      %v1227 = vpop.f32.mrf.mxu0
      %v1228 = vadd.f32 %v1124, %v1227
      %v1229 = vpop.f32.mrf.mxu0
      %1230 = vmatprep.mubr.bf16.mxu0 0
      %1231 = vmatmul.mubr.bf16.gmra.mxu0 %v1090
      %v1232 = vpop.f32.mrf.mxu0
      %v1233 = vadd.f32 %v1124, %v1232
      %v1234 = vpop.f32.mrf.mxu0
      %v1235 = vpop.f32.mrf.mxu0
      %v1236 = vadd.f32 %v1124, %v1235
      %v1237 = vpop.f32.mrf.mxu0
      %1238 = vmatprep.mubr.bf16.mxu0 0
      %1239 = vmatmul.mubr.bf16.gmra.mxu0 %v1091
      %v1240 = vpop.f32.mrf.mxu0
      %v1241 = vadd.f32 %v1124, %v1240
      %v1242 = vpop.f32.mrf.mxu0
      %v1243 = vpop.f32.mrf.mxu0
      %v1244 = vadd.f32 %v1124, %v1243
      %v1245 = vpop.f32.mrf.mxu0
      %1246 = vmatprep.mubr.bf16.mxu0 0
      %1247 = vmatmul.mubr.bf16.gmra.mxu0 %v1092
      %v1248 = vpop.f32.mrf.mxu0
      %v1249 = vadd.f32 %v1124, %v1248
      %v1250 = vpop.f32.mrf.mxu0
      %v1251 = vpop.f32.mrf.mxu0
      %v1252 = vadd.f32 %v1124, %v1251
      %v1253 = vpop.f32.mrf.mxu0
      %1254 = vmatprep.mubr.bf16.mxu0 0
      %1255 = vmatmul.mubr.bf16.gmra.mxu0 %v1093
      %v1256 = vpop.f32.mrf.mxu0
      %v1257 = vadd.f32 %v1124, %v1256
      %v1258 = vpop.f32.mrf.mxu0
      %v1259 = vpop.f32.mrf.mxu0
      %v1260 = vadd.f32 %v1124, %v1259
      %v1261 = vpop.f32.mrf.mxu0
      %1262 = vmatprep.mubr.bf16.mxu0 0
      %1263 = vmatmul.mubr.bf16.gmra.mxu0 %v1094
      %v1264 = vpop.f32.mrf.mxu0
      %v1265 = vadd.f32 %v1124, %v1264
      %v1266 = vpop.f32.mrf.mxu0
      %v1267 = vpop.f32.mrf.mxu0
      %v1268 = vadd.f32 %v1124, %v1267
      %v1269 = vpop.f32.mrf.mxu0
      %1270 = vmatprep.mubr.bf16.mxu0 0
      %1271 = vmatmul.mubr.bf16.gmra.mxu0 %v1095
      %v1272 = vpop.f32.mrf.mxu0
      %v1273 = vadd.f32 %v1124, %v1272
      %v1274 = vpop.f32.mrf.mxu0
      %v1275 = vpop.f32.mrf.mxu0
      %v1276 = vadd.f32 %v1124, %v1275
      %v1277 = vpop.f32.mrf.mxu0
      %1278 = vmatprep.mubr.bf16.mxu0 0
      %1279 = vmatmul.mubr.bf16.gmra.mxu0 %v1096
      %v1280 = vpop.f32.mrf.mxu0
      %v1281 = vadd.f32 %v1124, %v1280
      %v1282 = vpop.f32.mrf.mxu0
      %v1283 = vpop.f32.mrf.mxu0
      %v1284 = vadd.f32 %v1124, %v1283
      %v1285 = vpop.f32.mrf.mxu0
      %1286 = vmatprep.mubr.bf16.mxu0 0
      %1287 = vmatmul.mubr.bf16.gmra.mxu0 %v1097
      %v1288 = vpop.f32.mrf.mxu0
      %v1289 = vadd.f32 %v1124, %v1288
      %v1290 = vpop.f32.mrf.mxu0
      %v1291 = vpop.f32.mrf.mxu0
      %v1292 = vadd.f32 %v1124, %v1291
      %v1293 = vpop.f32.mrf.mxu0
      %1294 = vmatprep.mubr.bf16.mxu0 0
      %1295 = vmatmul.mubr.bf16.gmra.mxu0 %v1098
      %v1296 = vpop.f32.mrf.mxu0
      %v1297 = vadd.f32 %v1124, %v1296
      %v1298 = vpop.f32.mrf.mxu0
      %v1299 = vpop.f32.mrf.mxu0
      %v1300 = vadd.f32 %v1124, %v1299
      %v1301 = vpop.f32.mrf.mxu0
      %1302 = vmatprep.mubr.bf16.mxu0 0
      %1303 = vmatmul.mubr.bf16.gmra.mxu0 %v1099
      %v1304 = vpop.f32.mrf.mxu0
      %v1305 = vadd.f32 %v1124, %v1304
      %v1306 = vpop.f32.mrf.mxu0
      %v1307 = vpop.f32.mrf.mxu0
      %v1308 = vadd.f32 %v1124, %v1307
      %v1309 = vpop.f32.mrf.mxu0
      %1310 = vmatprep.mubr.bf16.mxu0 0
      %1311 = vmatmul.mubr.bf16.gmra.mxu0 %v1100
      %v1312 = vpop.f32.mrf.mxu0
      %v1313 = vadd.f32 %v1124, %v1312
      %v1314 = vpop.f32.mrf.mxu0
      %v1315 = vpop.f32.mrf.mxu0
      %v1316 = vadd.f32 %v1124, %v1315
      %v1317 = vpop.f32.mrf.mxu0
      %1318 = vmatprep.mubr.bf16.mxu0 0
      %1319 = vmatmul.mubr.bf16.gmra.mxu0 %v1101
      %v1320 = vpop.f32.mrf.mxu0
      %v1321 = vadd.f32 %v1124, %v1320
      %v1322 = vpop.f32.mrf.mxu0
      %v1323 = vpop.f32.mrf.mxu0
      %v1324 = vadd.f32 %v1124, %v1323
      %v1325 = vpop.f32.mrf.mxu0
      %1326 = vmatprep.mubr.bf16.mxu0 0
      %1327 = vmatmul.mubr.bf16.gmra.mxu0 %v1102
      %v1328 = vpop.f32.mrf.mxu0
      %v1329 = vadd.f32 %v1124, %v1328
      %v1330 = vpop.f32.mrf.mxu0
      %v1331 = vpop.f32.mrf.mxu0
      %v1332 = vadd.f32 %v1124, %v1331
      %v1333 = vpop.f32.mrf.mxu0
      %1334 = vdwg.mxu0
      %v1335 = vmax.f32 %v1209, 0.0
      %v1336 = vmax.f32 %v1212, 0.0
      %v1337 = vmax.f32 %v1217, 0.0
      %v1338 = vmax.f32 %v1220, 0.0
      %v1339 = vmax.f32 %v1225, 0.0
      %v1340 = vmax.f32 %v1228, 0.0
      %v1341 = vmax.f32 %v1233, 0.0
      %v1342 = vmax.f32 %v1236, 0.0
      %v1343 = vmax.f32 %v1241, 0.0
      %v1344 = vmax.f32 %v1244, 0.0
      %v1345 = vmax.f32 %v1249, 0.0
      %v1346 = vmax.f32 %v1252, 0.0
      %v1347 = vmax.f32 %v1257, 0.0
      %v1348 = vmax.f32 %v1260, 0.0
      %v1349 = vmax.f32 %v1265, 0.0
      %v1350 = vmax.f32 %v1268, 0.0
      %v1351 = vmax.f32 %v1273, 0.0
      %v1352 = vmax.f32 %v1276, 0.0
      %v1353 = vmax.f32 %v1281, 0.0
      %v1354 = vmax.f32 %v1284, 0.0
      %v1355 = vmax.f32 %v1289, 0.0
      %v1356 = vmax.f32 %v1292, 0.0
      %v1357 = vmax.f32 %v1297, 0.0
      %v1358 = vmax.f32 %v1300, 0.0
      %v1359 = vmax.f32 %v1305, 0.0
      %v1360 = vmax.f32 %v1308, 0.0
      %v1361 = vmax.f32 %v1313, 0.0
      %v1362 = vmax.f32 %v1316, 0.0
      %v1363 = vmax.f32 %v1321, 0.0
      %v1364 = vmax.f32 %v1324, 0.0
      %v1365 = vmax.f32 %v1329, 0.0
      %v1366 = vmax.f32 %v1332, 0.0
      %v1367 = vpack.c.bf16 %v1336, %v1335
      %v1368 = vpack.c.bf16 %v1338, %v1337
      %v1369 = vpack.c.bf16 %v1340, %v1339
      %v1370 = vpack.c.bf16 %v1342, %v1341
      %v1371 = vpack.c.bf16 %v1344, %v1343
      %v1372 = vpack.c.bf16 %v1346, %v1345
      %v1373 = vpack.c.bf16 %v1348, %v1347
      %v1374 = vpack.c.bf16 %v1350, %v1349
      %v1375 = vpack.c.bf16 %v1352, %v1351
      %v1376 = vpack.c.bf16 %v1354, %v1353
      %v1377 = vpack.c.bf16 %v1356, %v1355
      %v1378 = vpack.c.bf16 %v1358, %v1357
      %v1379 = vpack.c.bf16 %v1360, %v1359
      %v1380 = vpack.c.bf16 %v1362, %v1361
      %v1381 = vpack.c.bf16 %v1364, %v1363
      %v1382 = vpack.c.bf16 %v1366, %v1365
      %v1383 = vld [vmem:[%s7] sm:$0xf]
      %v1384 = vld [vmem:[%s7 + $0x4] sm:$0xf]
      %v1385 = vld [vmem:[%s7 + $0x8] sm:$0xf]
      %v1386 = vld [vmem:[%s7 + $0xc] sm:$0xf]
      %v1387 = vld [vmem:[%s7 + $0x10] sm:$0xf]
      %v1388 = vld [vmem:[%s7 + $0x14] sm:$0xf]
      %v1389 = vld [vmem:[%s7 + $0x18] sm:$0xf]
      %v1390 = vld [vmem:[%s7 + $0x1c] sm:$0xf]
      %v1391 = vld [vmem:[%s7 + $0x20] sm:$0xf]
      %v1392 = vld [vmem:[%s7 + $0x24] sm:$0xf]
      %v1393 = vld [vmem:[%s7 + $0x28] sm:$0xf]
      %v1394 = vld [vmem:[%s7 + $0x2c] sm:$0xf]
      %v1395 = vld [vmem:[%s7 + $0x30] sm:$0xf]
      %v1396 = vld [vmem:[%s7 + $0x34] sm:$0xf]
      %v1397 = vld [vmem:[%s7 + $0x38] sm:$0xf]
      %v1398 = vld [vmem:[%s7 + $0x3c] sm:$0xf]
      %v1399 = vld [vmem:[%s8] sm:$0x1]
      %v1401 = vlaneseq
      %v1402 = vshrl.u32 %v1401, 7
      %v1403 = vsub.s32 0, %v1402
      %v1404 = vrot.slane %v1399, %v1403
      %v1422 = vunpack.c.l.b16 %v1383
      %v1423 = vunpack.c.l.b16 %v1384
      %v1424 = vunpack.c.l.b16 %v1385
      %v1425 = vunpack.c.l.b16 %v1386
      %v1426 = vunpack.c.l.b16 %v1387
      %v1427 = vunpack.c.l.b16 %v1388
      %v1428 = vunpack.c.l.b16 %v1389
      %v1429 = vunpack.c.l.b16 %v1390
      %v1430 = vunpack.c.l.b16 %v1391
      %v1431 = vunpack.c.l.b16 %v1392
      %v1432 = vunpack.c.l.b16 %v1393
      %v1433 = vunpack.c.l.b16 %v1394
      %v1434 = vunpack.c.l.b16 %v1395
      %v1435 = vunpack.c.l.b16 %v1396
      %v1436 = vunpack.c.l.b16 %v1397
      %v1437 = vunpack.c.l.b16 %v1398
      %v1438 = vpack.c.b16 %v1423, %v1422
      %v1439 = vpack.c.b16 %v1425, %v1424
      %v1440 = vpack.c.b16 %v1427, %v1426
      %v1441 = vpack.c.b16 %v1429, %v1428
      %v1442 = vpack.c.b16 %v1431, %v1430
      %v1443 = vpack.c.b16 %v1433, %v1432
      %v1444 = vpack.c.b16 %v1435, %v1434
      %v1445 = vpack.c.b16 %v1437, %v1436
      %1454 = vmatprep.subr.bf16.mxu0 0
      %1455 = vmatpush1.bf16.msra.mxu0 %v1445
      %1456 = vmatprep.subr.bf16.mxu0 0
      %1457 = vmatpush1.bf16.msra.mxu0 %v1444
      %1458 = vmatprep.subr.bf16.mxu0 0
      %1459 = vmatpush1.bf16.msra.mxu0 %v1443
      %1460 = vmatprep.subr.bf16.mxu0 0
      %1461 = vmatpush1.bf16.msra.mxu0 %v1442
      %1462 = vmatprep.subr.bf16.mxu0 0
      %1463 = vmatpush1.bf16.msra.mxu0 %v1441
      %1464 = vmatprep.subr.bf16.mxu0 0
      %1465 = vmatpush1.bf16.msra.mxu0 %v1440
      %1466 = vmatprep.subr.bf16.mxu0 0
      %1467 = vmatpush1.bf16.msra.mxu0 %v1439
      %1468 = vmatprep.subr.bf16.mxu0 0
      %1469 = vmatpush1.bf16.msra.mxu0 %v1438
      %1470 = vmatprep.subr.bf16.mxu0 0
      %1471 = vmatpush2.bf16.msra.mxu0 0
      %1472 = vmatprep.subr.bf16.mxu0 0
      %1473 = vmatpush2.bf16.msra.mxu0 0
      %1474 = vmatprep.subr.bf16.mxu0 0
      %1475 = vmatpush2.bf16.msra.mxu0 0
      %1476 = vmatprep.subr.bf16.mxu0 0
      %1477 = vmatpush2.bf16.msra.mxu0 0
      %1478 = vmatprep.subr.bf16.mxu0 0
      %1479 = vmatpush2.bf16.msra.mxu0 0
      %1480 = vmatprep.subr.bf16.mxu0 0
      %1481 = vmatpush2.bf16.msra.mxu0 0
      %1482 = vmatprep.subr.bf16.mxu0 0
      %1483 = vmatpush2.bf16.msra.mxu0 0
      %1484 = vmatprep.subr.bf16.mxu0 0
      %1485 = vmatpush2.bf16.msra.mxu0 0
      %1486 = vmatprep.mubr.bf16.mxu0 0
      %1487 = vmatmul.mubr.bf16.gmra.mxu0 %v1367
      %v1488 = vpop.f32.mrf.mxu0
      %v1489 = vadd.f32 %v1404, %v1488
      %v1490 = vpop.f32.mrf.mxu0
      %v1491 = vpop.f32.mrf.mxu0
      %v1492 = vadd.f32 %v1404, %v1491
      %v1493 = vpop.f32.mrf.mxu0
      %1494 = vmatprep.mubr.bf16.mxu0 0
      %1495 = vmatmul.mubr.bf16.gmra.mxu0 %v1368
      %v1496 = vpop.f32.mrf.mxu0
      %v1497 = vadd.f32 %v1404, %v1496
      %v1498 = vpop.f32.mrf.mxu0
      %v1499 = vpop.f32.mrf.mxu0
      %v1500 = vadd.f32 %v1404, %v1499
      %v1501 = vpop.f32.mrf.mxu0
      %1502 = vmatprep.mubr.bf16.mxu0 0
      %1503 = vmatmul.mubr.bf16.gmra.mxu0 %v1369
      %v1504 = vpop.f32.mrf.mxu0
      %v1505 = vadd.f32 %v1404, %v1504
      %v1506 = vpop.f32.mrf.mxu0
      %v1507 = vpop.f32.mrf.mxu0
      %v1508 = vadd.f32 %v1404, %v1507
      %v1509 = vpop.f32.mrf.mxu0
      %1510 = vmatprep.mubr.bf16.mxu0 0
      %1511 = vmatmul.mubr.bf16.gmra.mxu0 %v1370
      %v1512 = vpop.f32.mrf.mxu0
      %v1513 = vadd.f32 %v1404, %v1512
      %v1514 = vpop.f32.mrf.mxu0
      %v1515 = vpop.f32.mrf.mxu0
      %v1516 = vadd.f32 %v1404, %v1515
      %v1517 = vpop.f32.mrf.mxu0
      %1518 = vmatprep.mubr.bf16.mxu0 0
      %1519 = vmatmul.mubr.bf16.gmra.mxu0 %v1371
      %v1520 = vpop.f32.mrf.mxu0
      %v1521 = vadd.f32 %v1404, %v1520
      %v1522 = vpop.f32.mrf.mxu0
      %v1523 = vpop.f32.mrf.mxu0
      %v1524 = vadd.f32 %v1404, %v1523
      %v1525 = vpop.f32.mrf.mxu0
      %1526 = vmatprep.mubr.bf16.mxu0 0
      %1527 = vmatmul.mubr.bf16.gmra.mxu0 %v1372
      %v1528 = vpop.f32.mrf.mxu0
      %v1529 = vadd.f32 %v1404, %v1528
      %v1530 = vpop.f32.mrf.mxu0
      %v1531 = vpop.f32.mrf.mxu0
      %v1532 = vadd.f32 %v1404, %v1531
      %v1533 = vpop.f32.mrf.mxu0
      %1534 = vmatprep.mubr.bf16.mxu0 0
      %1535 = vmatmul.mubr.bf16.gmra.mxu0 %v1373
      %v1536 = vpop.f32.mrf.mxu0
      %v1537 = vadd.f32 %v1404, %v1536
      %v1538 = vpop.f32.mrf.mxu0
      %v1539 = vpop.f32.mrf.mxu0
      %v1540 = vadd.f32 %v1404, %v1539
      %v1541 = vpop.f32.mrf.mxu0
      %1542 = vmatprep.mubr.bf16.mxu0 0
      %1543 = vmatmul.mubr.bf16.gmra.mxu0 %v1374
      %v1544 = vpop.f32.mrf.mxu0
      %v1545 = vadd.f32 %v1404, %v1544
      %v1546 = vpop.f32.mrf.mxu0
      %v1547 = vpop.f32.mrf.mxu0
      %v1548 = vadd.f32 %v1404, %v1547
      %v1549 = vpop.f32.mrf.mxu0
      %1550 = vmatprep.mubr.bf16.mxu0 0
      %1551 = vmatmul.mubr.bf16.gmra.mxu0 %v1375
      %v1552 = vpop.f32.mrf.mxu0
      %v1553 = vadd.f32 %v1404, %v1552
      %v1554 = vpop.f32.mrf.mxu0
      %v1555 = vpop.f32.mrf.mxu0
      %v1556 = vadd.f32 %v1404, %v1555
      %v1557 = vpop.f32.mrf.mxu0
      %1558 = vmatprep.mubr.bf16.mxu0 0
      %1559 = vmatmul.mubr.bf16.gmra.mxu0 %v1376
      %v1560 = vpop.f32.mrf.mxu0
      %v1561 = vadd.f32 %v1404, %v1560
      %v1562 = vpop.f32.mrf.mxu0
      %v1563 = vpop.f32.mrf.mxu0
      %v1564 = vadd.f32 %v1404, %v1563
      %v1565 = vpop.f32.mrf.mxu0
      %1566 = vmatprep.mubr.bf16.mxu0 0
      %1567 = vmatmul.mubr.bf16.gmra.mxu0 %v1377
      %v1568 = vpop.f32.mrf.mxu0
      %v1569 = vadd.f32 %v1404, %v1568
      %v1570 = vpop.f32.mrf.mxu0
      %v1571 = vpop.f32.mrf.mxu0
      %v1572 = vadd.f32 %v1404, %v1571
      %v1573 = vpop.f32.mrf.mxu0
      %1574 = vmatprep.mubr.bf16.mxu0 0
      %1575 = vmatmul.mubr.bf16.gmra.mxu0 %v1378
      %v1576 = vpop.f32.mrf.mxu0
      %v1577 = vadd.f32 %v1404, %v1576
      %v1578 = vpop.f32.mrf.mxu0
      %v1579 = vpop.f32.mrf.mxu0
      %v1580 = vadd.f32 %v1404, %v1579
      %v1581 = vpop.f32.mrf.mxu0
      %1582 = vmatprep.mubr.bf16.mxu0 0
      %1583 = vmatmul.mubr.bf16.gmra.mxu0 %v1379
      %v1584 = vpop.f32.mrf.mxu0
      %v1585 = vadd.f32 %v1404, %v1584
      %v1586 = vpop.f32.mrf.mxu0
      %v1587 = vpop.f32.mrf.mxu0
      %v1588 = vadd.f32 %v1404, %v1587
      %v1589 = vpop.f32.mrf.mxu0
      %1590 = vmatprep.mubr.bf16.mxu0 0
      %1591 = vmatmul.mubr.bf16.gmra.mxu0 %v1380
      %v1592 = vpop.f32.mrf.mxu0
      %v1593 = vadd.f32 %v1404, %v1592
      %v1594 = vpop.f32.mrf.mxu0
      %v1595 = vpop.f32.mrf.mxu0
      %v1596 = vadd.f32 %v1404, %v1595
      %v1597 = vpop.f32.mrf.mxu0
      %1598 = vmatprep.mubr.bf16.mxu0 0
      %1599 = vmatmul.mubr.bf16.gmra.mxu0 %v1381
      %v1600 = vpop.f32.mrf.mxu0
      %v1601 = vadd.f32 %v1404, %v1600
      %v1602 = vpop.f32.mrf.mxu0
      %v1603 = vpop.f32.mrf.mxu0
      %v1604 = vadd.f32 %v1404, %v1603
      %v1605 = vpop.f32.mrf.mxu0
      %1606 = vmatprep.mubr.bf16.mxu0 0
      %1607 = vmatmul.mubr.bf16.gmra.mxu0 %v1382
      %v1608 = vpop.f32.mrf.mxu0
      %v1609 = vadd.f32 %v1404, %v1608
      %v1610 = vpop.f32.mrf.mxu0
      %v1611 = vpop.f32.mrf.mxu0
      %v1612 = vadd.f32 %v1404, %v1611
      %v1613 = vpop.f32.mrf.mxu0
      %1614 = vdwg.mxu0
      %v1615 = vxor.u32 %v1489, 2147483648
      %v1616 = vxor.u32 %v1492, 2147483648
      %v1617 = vxor.u32 %v1497, 2147483648
      %v1618 = vxor.u32 %v1500, 2147483648
      %v1619 = vxor.u32 %v1505, 2147483648
      %v1620 = vxor.u32 %v1508, 2147483648
      %v1621 = vxor.u32 %v1513, 2147483648
      %v1622 = vxor.u32 %v1516, 2147483648
      %v1623 = vxor.u32 %v1521, 2147483648
      %v1624 = vxor.u32 %v1524, 2147483648
      %v1625 = vxor.u32 %v1529, 2147483648
      %v1626 = vxor.u32 %v1532, 2147483648
      %v1627 = vxor.u32 %v1537, 2147483648
      %v1628 = vxor.u32 %v1540, 2147483648
      %v1629 = vxor.u32 %v1545, 2147483648
      %v1630 = vxor.u32 %v1548, 2147483648
      %v1631 = vxor.u32 %v1553, 2147483648
      %v1632 = vxor.u32 %v1556, 2147483648
      %v1633 = vxor.u32 %v1561, 2147483648
      %v1634 = vxor.u32 %v1564, 2147483648
      %v1635 = vxor.u32 %v1569, 2147483648
      %v1636 = vxor.u32 %v1572, 2147483648
      %v1637 = vxor.u32 %v1577, 2147483648
      %v1638 = vxor.u32 %v1580, 2147483648
      %v1639 = vxor.u32 %v1585, 2147483648
      %v1640 = vxor.u32 %v1588, 2147483648
      %v1641 = vxor.u32 %v1593, 2147483648
      %v1642 = vxor.u32 %v1596, 2147483648
      %v1643 = vxor.u32 %v1601, 2147483648
      %v1644 = vxor.u32 %v1604, 2147483648
      %v1645 = vxor.u32 %v1609, 2147483648
      %v1646 = vxor.u32 %v1612, 2147483648
      %v1647 = vmul.f32 %v1615, 1.442695
      %v1648 = vpow.pop %v1647
      %v1649 = vmul.f32 %v1616, 1.442695
      %v1650 = vpow.pop %v1649
      %v1651 = vmul.f32 %v1617, 1.442695
      %v1652 = vpow.pop %v1651
      %v1653 = vmul.f32 %v1618, 1.442695
      %v1654 = vpow.pop %v1653
      %v1655 = vmul.f32 %v1619, 1.442695
      %v1656 = vpow.pop %v1655
      %v1657 = vmul.f32 %v1620, 1.442695
      %v1658 = vpow.pop %v1657
      %v1659 = vmul.f32 %v1621, 1.442695
      %v1660 = vpow.pop %v1659
      %v1661 = vmul.f32 %v1622, 1.442695
      %v1662 = vpow.pop %v1661
      %v1663 = vmul.f32 %v1623, 1.442695
      %v1664 = vpow.pop %v1663
      %v1665 = vmul.f32 %v1624, 1.442695
      %v1666 = vpow.pop %v1665
      %v1667 = vmul.f32 %v1625, 1.442695
      %v1668 = vpow.pop %v1667
      %v1669 = vmul.f32 %v1626, 1.442695
      %v1670 = vpow.pop %v1669
      %v1671 = vmul.f32 %v1627, 1.442695
      %v1672 = vpow.pop %v1671
      %v1673 = vmul.f32 %v1628, 1.442695
      %v1674 = vpow.pop %v1673
      %v1675 = vmul.f32 %v1629, 1.442695
      %v1676 = vpow.pop %v1675
      %v1677 = vmul.f32 %v1630, 1.442695
      %v1678 = vpow.pop %v1677
      %v1679 = vmul.f32 %v1631, 1.442695
      %v1680 = vpow.pop %v1679
      %v1681 = vmul.f32 %v1632, 1.442695
      %v1682 = vpow.pop %v1681
      %v1683 = vmul.f32 %v1633, 1.442695
      %v1684 = vpow.pop %v1683
      %v1685 = vmul.f32 %v1634, 1.442695
      %v1686 = vpow.pop %v1685
      %v1687 = vmul.f32 %v1635, 1.442695
      %v1688 = vpow.pop %v1687
      %v1689 = vmul.f32 %v1636, 1.442695
      %v1690 = vpow.pop %v1689
      %v1691 = vmul.f32 %v1637, 1.442695
      %v1692 = vpow.pop %v1691
      %v1693 = vmul.f32 %v1638, 1.442695
      %v1694 = vpow.pop %v1693
      %v1695 = vmul.f32 %v1639, 1.442695
      %v1696 = vpow.pop %v1695
      %v1697 = vmul.f32 %v1640, 1.442695
      %v1698 = vpow.pop %v1697
      %v1699 = vmul.f32 %v1641, 1.442695
      %v1700 = vpow.pop %v1699
      %v1701 = vmul.f32 %v1642, 1.442695
      %v1702 = vpow.pop %v1701
      %v1703 = vmul.f32 %v1643, 1.442695
      %v1704 = vpow.pop %v1703
      %v1705 = vmul.f32 %v1644, 1.442695
      %v1706 = vpow.pop %v1705
      %v1707 = vmul.f32 %v1645, 1.442695
      %v1708 = vpow.pop %v1707
      %v1709 = vmul.f32 %v1646, 1.442695
      %v1710 = vpow.pop %v1709
      %v1711 = vadd.f32 %v1648, 1.0
      %v1712 = vadd.f32 %v1650, 1.0
      %v1713 = vadd.f32 %v1652, 1.0
      %v1714 = vadd.f32 %v1654, 1.0
      %v1715 = vadd.f32 %v1656, 1.0
      %v1716 = vadd.f32 %v1658, 1.0
      %v1717 = vadd.f32 %v1660, 1.0
      %v1718 = vadd.f32 %v1662, 1.0
      %v1719 = vadd.f32 %v1664, 1.0
      %v1720 = vadd.f32 %v1666, 1.0
      %v1721 = vadd.f32 %v1668, 1.0
      %v1722 = vadd.f32 %v1670, 1.0
      %v1723 = vadd.f32 %v1672, 1.0
      %v1724 = vadd.f32 %v1674, 1.0
      %v1725 = vadd.f32 %v1676, 1.0
      %v1726 = vadd.f32 %v1678, 1.0
      %v1727 = vadd.f32 %v1680, 1.0
      %v1728 = vadd.f32 %v1682, 1.0
      %v1729 = vadd.f32 %v1684, 1.0
      %v1730 = vadd.f32 %v1686, 1.0
      %v1731 = vadd.f32 %v1688, 1.0
      %v1732 = vadd.f32 %v1690, 1.0
      %v1733 = vadd.f32 %v1692, 1.0
      %v1734 = vadd.f32 %v1694, 1.0
      %v1735 = vadd.f32 %v1696, 1.0
      %v1736 = vadd.f32 %v1698, 1.0
      %v1737 = vadd.f32 %v1700, 1.0
      %v1738 = vadd.f32 %v1702, 1.0
      %v1739 = vadd.f32 %v1704, 1.0
      %v1740 = vadd.f32 %v1706, 1.0
      %v1741 = vadd.f32 %v1708, 1.0
      %v1742 = vadd.f32 %v1710, 1.0
      %v1743 = vrcp.pop %v1711
      %v1744 = vmul.f32 1.0, %v1743
      %v1745 = vrcp.pop %v1712
      %v1746 = vmul.f32 1.0, %v1745
      %v1747 = vrcp.pop %v1713
      %v1748 = vmul.f32 1.0, %v1747
      %v1749 = vrcp.pop %v1714
      %v1750 = vmul.f32 1.0, %v1749
      %v1751 = vrcp.pop %v1715
      %v1752 = vmul.f32 1.0, %v1751
      %v1753 = vrcp.pop %v1716
      %v1754 = vmul.f32 1.0, %v1753
      %v1755 = vrcp.pop %v1717
      %v1756 = vmul.f32 1.0, %v1755
      %v1757 = vrcp.pop %v1718
      %v1758 = vmul.f32 1.0, %v1757
      %v1759 = vrcp.pop %v1719
      %v1760 = vmul.f32 1.0, %v1759
      %v1761 = vrcp.pop %v1720
      %v1762 = vmul.f32 1.0, %v1761
      %v1763 = vrcp.pop %v1721
      %v1764 = vmul.f32 1.0, %v1763
      %v1765 = vrcp.pop %v1722
      %v1766 = vmul.f32 1.0, %v1765
      %v1767 = vrcp.pop %v1723
      %v1768 = vmul.f32 1.0, %v1767
      %v1769 = vrcp.pop %v1724
      %v1770 = vmul.f32 1.0, %v1769
      %v1771 = vrcp.pop %v1725
      %v1772 = vmul.f32 1.0, %v1771
      %v1773 = vrcp.pop %v1726
      %v1774 = vmul.f32 1.0, %v1773
      %v1775 = vrcp.pop %v1727
      %v1776 = vmul.f32 1.0, %v1775
      %v1777 = vrcp.pop %v1728
      %v1778 = vmul.f32 1.0, %v1777
      %v1779 = vrcp.pop %v1729
      %v1780 = vmul.f32 1.0, %v1779
      %v1781 = vrcp.pop %v1730
      %v1782 = vmul.f32 1.0, %v1781
      %v1783 = vrcp.pop %v1731
      %v1784 = vmul.f32 1.0, %v1783
      %v1785 = vrcp.pop %v1732
      %v1786 = vmul.f32 1.0, %v1785
      %v1787 = vrcp.pop %v1733
      %v1788 = vmul.f32 1.0, %v1787
      %v1789 = vrcp.pop %v1734
      %v1790 = vmul.f32 1.0, %v1789
      %v1791 = vrcp.pop %v1735
      %v1792 = vmul.f32 1.0, %v1791
      %v1793 = vrcp.pop %v1736
      %v1794 = vmul.f32 1.0, %v1793
      %v1795 = vrcp.pop %v1737
      %v1796 = vmul.f32 1.0, %v1795
      %v1797 = vrcp.pop %v1738
      %v1798 = vmul.f32 1.0, %v1797
      %v1799 = vrcp.pop %v1739
      %v1800 = vmul.f32 1.0, %v1799
      %v1801 = vrcp.pop %v1740
      %v1802 = vmul.f32 1.0, %v1801
      %v1803 = vrcp.pop %v1741
      %v1804 = vmul.f32 1.0, %v1803
      %v1805 = vrcp.pop %v1742
      %v1806 = vmul.f32 1.0, %v1805
      %1807 = vst.msk [vmem:[%s356] sm:$0xff] %vm806, %v1744
      %1808 = vst.msk [vmem:[%s356 + $0x8] sm:$0xff] %vm806, %v1746
      %1809 = vst.msk [vmem:[%s356 + $0x10] sm:$0xff] %vm806, %v1748
      %1810 = vst.msk [vmem:[%s356 + $0x18] sm:$0xff] %vm806, %v1750
      %1811 = vst.msk [vmem:[%s356 + $0x20] sm:$0xff] %vm806, %v1752
      %1812 = vst.msk [vmem:[%s356 + $0x28] sm:$0xff] %vm806, %v1754
      %1813 = vst.msk [vmem:[%s356 + $0x30] sm:$0xff] %vm806, %v1756
      %1814 = vst.msk [vmem:[%s356 + $0x38] sm:$0xff] %vm806, %v1758
      %1815 = vst.msk [vmem:[%s356 + $0x40] sm:$0xff] %vm806, %v1760
      %1816 = vst.msk [vmem:[%s356 + $0x48] sm:$0xff] %vm806, %v1762
      %1817 = vst.msk [vmem:[%s356 + $0x50] sm:$0xff] %vm806, %v1764
      %1818 = vst.msk [vmem:[%s356 + $0x58] sm:$0xff] %vm806, %v1766
      %1819 = vst.msk [vmem:[%s356 + $0x60] sm:$0xff] %vm806, %v1768
      %1820 = vst.msk [vmem:[%s356 + $0x68] sm:$0xff] %vm806, %v1770
      %1821 = vst.msk [vmem:[%s356 + $0x70] sm:$0xff] %vm806, %v1772
      %1822 = vst.msk [vmem:[%s356 + $0x78] sm:$0xff] %vm806, %v1774
      %1823 = vst.msk [vmem:[%s356 + $0x80] sm:$0xff] %vm806, %v1776
      %1824 = vst.msk [vmem:[%s356 + $0x88] sm:$0xff] %vm806, %v1778
      %1825 = vst.msk [vmem:[%s356 + $0x90] sm:$0xff] %vm806, %v1780
      %1826 = vst.msk [vmem:[%s356 + $0x98] sm:$0xff] %vm806, %v1782
      %1827 = vst.msk [vmem:[%s356 + $0xa0] sm:$0xff] %vm806, %v1784
      %1828 = vst.msk [vmem:[%s356 + $0xa8] sm:$0xff] %vm806, %v1786
      %1829 = vst.msk [vmem:[%s356 + $0xb0] sm:$0xff] %vm806, %v1788
      %1830 = vst.msk [vmem:[%s356 + $0xb8] sm:$0xff] %vm806, %v1790
      %1831 = vst.msk [vmem:[%s356 + $0xc0] sm:$0xff] %vm806, %v1792
      %1832 = vst.msk [vmem:[%s356 + $0xc8] sm:$0xff] %vm806, %v1794
      %1833 = vst.msk [vmem:[%s356 + $0xd0] sm:$0xff] %vm806, %v1796
      %1834 = vst.msk [vmem:[%s356 + $0xd8] sm:$0xff] %vm806, %v1798
      %1835 = vst.msk [vmem:[%s356 + $0xe0] sm:$0xff] %vm806, %v1800
      %1836 = vst.msk [vmem:[%s356 + $0xe8] sm:$0xff] %vm806, %v1802
      %1837 = vst.msk [vmem:[%s356 + $0xf0] sm:$0xff] %vm806, %v1804
      %1838 = vst.msk [vmem:[%s356 + $0xf8] sm:$0xff] %vm806, %v1806
      %s1839 = smul.u32 32, %s20
      %p1840 = scmp.lt.s32.totalorder %s1839, 63
      %s1841 = scalar_select %p1840, %s1839, 63
      %s1842 = smul.addr %s1841, 8
      %s1843 = scalar_lea.vmem %s9, %s1842
      // Predicated region
      $region57: #{tpu_custom_call.1} parent=55 // pred_check
        %p1844 = pneg %p237
      $region58: #{tpu_custom_call.1} parent=55 // pred_check_branch
        %1846 = sbr.rel (%p1844) target = $region60
      $region59: #{tpu_custom_call.1} parent=55 // pred_region
        %s1847 = smul.u32 32, %s20
      $region60: #{tpu_custom_call.1} parent=55 // pred_fallthru
        _
    $region56: #{tpu_custom_call.1} parent=5 // pred_fallthru
      _
    %p1848 = scmp.le.s32.totalorder 2, %s15
    // Predicated region
    $region61: #{tpu_custom_call.1} parent=5 // pred_check
      %p1849 = pneg %p1848
    $region62: #{tpu_custom_call.1} parent=5 // pred_check_branch
      %1851 = sbr.rel (%p1849) target = $region64
    $region63: #{tpu_custom_call.1} parent=5 // pred_region
      %s1852 = ssub.s32 %s15, 2
      // Predicated region
      $region65: #{tpu_custom_call.1} parent=63 // pred_check
        %p1853 = pneg %p243
      $region66: #{tpu_custom_call.1} parent=63 // pred_check_branch
        %1855 = sbr.rel (%p1853) target = $region68
      $region67: #{tpu_custom_call.1} parent=63 // pred_region
        %s1856 = smul.u32 32, %s21
        %p1857 = scmp.lt.s32.totalorder %s1856, 63
        %s1858 = scalar_select %p1857, %s1856, 63
        %s1859 = smul.addr %s1858, 8
        %s1860 = scalar_lea.vmem %s9, %s1859
      $region68: #{tpu_custom_call.1} parent=63 // pred_fallthru
        _
    $region64: #{tpu_custom_call.1} parent=5 // pred_fallthru
      _
  $region6: #{tpu_custom_call.1} parent=0 // loop_footer
    %s19 = sadd.s32 1, %s15
  $region7: #{tpu_custom_call.1} parent=0 // loop_footer_branch
    %14 = sbr.rel target = $region3
  $region8: #{tpu_custom_call.1} parent=0 // loop_exit
    _

</llo_original>
